<compile_context>
chip_gen: v5e
topology: v5e:2x2
jax: 0.10.0
libtpu: 0.0.40
codegen_flags: <defaults>
</compile_context>

<pallas_src>
import functools

import jax
import jax.numpy as jnp
from jax.experimental import pallas as pl
from jax.experimental.pallas import tpu as pltpu


# ----------------------------------------------------------------------------
# GRU kernel: single layer, bidirectional (PyTorch nn.GRU semantics)
#   r = sigmoid(Wir x + bir + Whr h + bhr)
#   z = sigmoid(Wiz x + biz + Whz h + bhz)
#   n = tanh  (Win x + bin + r * (Whn h + bhn))
#   h = (1 - z) * n + z * h
# The input-gate terms (and bhr/bhz, which are plain adds) are precomputed
# outside and arrive as gi_r/gi_z/gi_n [S, 2B, H] per direction. Only bhn must
# stay inside because of r * (Whn h + bhn).
# Grid: (2,) over direction; direction 1 walks time in reverse.
# ----------------------------------------------------------------------------
def _gru_kernel(gi_r_ref, gi_z_ref, gi_n_ref, whh_ref, bhn_ref, hout_ref,
                *, seq_len):
    d = pl.program_id(0)

    whr = whh_ref[0]          # [H, H]
    whz = whh_ref[1]          # [H, H]
    whn = whh_ref[2]          # [H, H]
    bhn = bhn_ref[...]        # [1, H]

    def step(t, h):
        # forward direction: idx = t ; backward direction: idx = S-1-t
        idx = d * (seq_len - 1) + (1 - 2 * d) * t
        i_r = gi_r_ref[idx]   # [2B, H]  (bir + bhr already folded in)
        i_z = gi_z_ref[idx]   # [2B, H]  (biz + bhz already folded in)
        i_n = gi_n_ref[idx]   # [2B, H]  (bin folded in)
        r = jax.nn.sigmoid(
            i_r + jnp.dot(h, whr, preferred_element_type=jnp.float32))
        z = jax.nn.sigmoid(
            i_z + jnp.dot(h, whz, preferred_element_type=jnp.float32))
        n = jnp.tanh(
            i_n + r * (jnp.dot(h, whn, preferred_element_type=jnp.float32)
                       + bhn))
        return (1.0 - z) * n + z * h

    h0 = jnp.zeros(hout_ref.shape, jnp.float32)
    hout_ref[...] = jax.lax.fori_loop(0, seq_len, step, h0, unroll=True)


def gru_bidirectional_fused(gi_r, gi_z, gi_n, whh, bhn, *, seq_len, batch2,
                            hidden):
    """gi_*: [2, S, 2B, H]; whh: [2, 3, H, H]; bhn: [2, 1, H].

    Returns final hidden states [2(dir), 2B, H]."""
    S, B2, H = seq_len, batch2, hidden
    kernel = functools.partial(_gru_kernel, seq_len=S)
    gi_spec = pl.BlockSpec((None, S, B2, H), lambda d: (d, 0, 0, 0))
    return pl.pallas_call(
        kernel,
        out_shape=jax.ShapeDtypeStruct((2, B2, H), jnp.float32),
        grid_spec=pltpu.PrefetchScalarGridSpec(
            num_scalar_prefetch=0,
            grid=(2,),
            in_specs=[
                gi_spec,
                gi_spec,
                gi_spec,
                pl.BlockSpec((None, 3, H, H), lambda d: (d, 0, 0, 0)),
                pl.BlockSpec((None, 1, H), lambda d: (d, 0, 0)),
            ],
            out_specs=pl.BlockSpec((None, B2, H), lambda d: (d, 0, 0)),
        ),
        # Direction axis is fully independent -> shard across TCs on v7x.
        compiler_params=pltpu.CompilerParams(
            dimension_semantics=("parallel",)),
    )(gi_r, gi_z, gi_n, whh, bhn)


# ----------------------------------------------------------------------------
# Head kernel: one stacked linear projection + negative batched sq. distance
#   o = [hid1; hid2] @ W + b                          [2B, O]
#   logits[b, j] = -sum_i (o1[b, j] - o2[b, i])^2
#               = -(O * o1[b,j]^2 - 2*o1[b,j]*sum_i o2[b,i] + sum_i o2[b,i]^2)
# (matches __batch_dist__ with S.unsqueeze(1), Q.unsqueeze(2), sum over dim 1)
# ----------------------------------------------------------------------------
def _head_kernel(hid_ref, w_ref, b_ref, out_ref, *, batch):
    o = jnp.dot(hid_ref[...], w_ref[...],
                preferred_element_type=jnp.float32) + b_ref[...]   # [2B, O]
    o1 = o[:batch, :]                                              # [B, O]
    o2 = o[batch:, :]                                              # [B, O]
    num_out = o.shape[1]
    s2 = jnp.sum(o2, axis=1, keepdims=True)                        # [B, 1]
    q2 = jnp.sum(o2 * o2, axis=1, keepdims=True)                   # [B, 1]
    out_ref[...] = -(num_out * o1 * o1 - 2.0 * o1 * s2 + q2)


def similarity_head(hid_stacked, w_out, b_out, batch):
    O = w_out.shape[1]
    kernel = functools.partial(_head_kernel, batch=batch)
    vmem = pl.BlockSpec(memory_space=pltpu.MemorySpace.VMEM)
    return pl.pallas_call(
        kernel,
        out_shape=jax.ShapeDtypeStruct((batch, O), jnp.float32),
        in_specs=[vmem, vmem, vmem],
        out_specs=vmem,
    )(hid_stacked, w_out, b_out)


# ----------------------------------------------------------------------------
# Full forward (glue in plain JAX, hot paths in Pallas)
# ----------------------------------------------------------------------------
def bert_gru_similarity_forward(params, text1, text2):
    H = params["hidden_dim"]
    B, S = text1.shape

    # BERT stand-in: embedding lookup -> [2B, S, E]  (text1 rows then text2)
    emb = params["embed_table"][jnp.concatenate([text1, text2], axis=0)]

    wih, whh = params["wih"], params["whh"]    # [2,3,E,H], [2,3,H,H]
    bih, bhh = params["bih"], params["bhh"]    # [2,3,H],   [2,3,H]

    # Hoisted input-gate matmul for all timesteps of both texts, both
    # directions: [2, 3, S, 2B, H], time-major per direction.
    gi = jnp.einsum('bse,dgeh->dgsbh', emb, wih)
    # Fold biases: r/z gates get bih + bhh (plain adds); n gate gets only bih.
    gate_mask = jnp.array([1.0, 1.0, 0.0], jnp.float32)
    bias = bih + bhh * gate_mask[None, :, None]            # [2, 3, H]
    gi = gi + bias[:, :, None, None, :]
    gi_r, gi_z, gi_n = gi[:, 0], gi[:, 1], gi[:, 2]        # each [2, S, 2B, H]
    bhn = bhh[:, 2][:, None, :]                            # [2, 1, H]

    h_all = gru_bidirectional_fused(gi_r, gi_z, gi_n, whh, bhn,
                                    seq_len=S, batch2=2 * B, hidden=H)

    # cat(hidden[-2], hidden[-1]) == cat(fwd, bwd); dropout = identity (eval).
    hid = jnp.concatenate([h_all[0], h_all[1]], axis=1)    # [2B, 2H]
    return similarity_head(hid, params["w_out"], params["b_out"], B)


# ----------------------------------------------------------------------------
# Pure-JAX reference (for correctness check)
# ----------------------------------------------------------------------------
def _gru_ref(x_bse, wih, whh, bih, bhh, H):
    x_tm = jnp.transpose(x_bse, (1, 0, 2))  # [S, B, E]

    def run_dir(xs, d):
        def step(h, x):
            gi = jnp.einsum('be,geh->gbh', x, wih[d]) + bih[d][:, None, :]
            gh = jnp.einsum('bh,ghk->gbk', h, whh[d]) + bhh[d][:, None, :]
            r = jax.nn.sigmoid(gi[0] + gh[0])
            z = jax.nn.sigmoid(gi[1] + gh[1])
            n = jnp.tanh(gi[2] + r * gh[2])
            return (1.0 - z) * n + z * h, None

        h0 = jnp.zeros((xs.shape[1], H), jnp.float32)
        hT, _ = jax.lax.scan(step, h0, xs)
        return hT

    return jnp.stack([run_dir(x_tm, 0), run_dir(x_tm[::-1], 1)])


def _forward_ref(params, text1, text2):
    H = params["hidden_dim"]
    emb1 = params["embed_table"][text1]
    emb2 = params["embed_table"][text2]
    h1 = _gru_ref(emb1, params["wih"], params["whh"], params["bih"],
                  params["bhh"], H)
    h2 = _gru_ref(emb2, params["wih"], params["whh"], params["bih"],
                  params["bhh"], H)
    hid1 = jnp.concatenate([h1[0], h1[1]], axis=1)
    hid2 = jnp.concatenate([h2[0], h2[1]], axis=1)
    o1 = hid1 @ params["w_out"] + params["b_out"]
    o2 = hid2 @ params["w_out"] + params["b_out"]
    diff = o1[:, None, :] - o2[:, :, None]       # [B, O, O]
    return -jnp.sum(diff * diff, axis=1)


# ----------------------------------------------------------------------------
def make_params(key, vocab, E, H, O):
    ks = jax.random.split(key, 8)
    k_gru = 1.0 / jnp.sqrt(jnp.float32(H))
    k_out = 1.0 / jnp.sqrt(jnp.float32(2 * H))
    u = lambda k, shape, s: jax.random.uniform(k, shape, jnp.float32, -s, s)
    return {
        "hidden_dim": H,
        "embed_table": 0.1 * jax.random.normal(ks[0], (vocab, E), jnp.float32),
        # GRU params per direction with a per-gate leading axis (gate order
        # r, z, n); weights stored transposed vs PyTorch for right-multiply.
        "wih": u(ks[1], (2, 3, E, H), k_gru),
        "whh": u(ks[2], (2, 3, H, H), k_gru),
        "bih": u(ks[3], (2, 3, H), k_gru),
        "bhh": u(ks[4], (2, 3, H), k_gru),
        # nn.Linear(2H, O), stored as [2H, O]
        "w_out": u(ks[5], (2 * H, O), k_out),
        "b_out": u(ks[6], (1, O), k_out),
    }


if __name__ == "__main__":
    B, S, E, H, O, VOCAB = 2, 8, 32, 32, 8, 50

    key = jax.random.PRNGKey(0)
    k_params, k_t1, k_t2 = jax.random.split(key, 3)
    params = make_params(k_params, VOCAB, E, H, O)

    text1 = jax.random.randint(k_t1, (B, S), 0, VOCAB, dtype=jnp.int32)
    text2 = jax.random.randint(k_t2, (B, S), 0, VOCAB, dtype=jnp.int32)

    logits = bert_gru_similarity_forward(params, text1, text2)
    logits = jax.block_until_ready(logits)

    ref = jax.block_until_ready(_forward_ref(params, text1, text2))
    assert logits.shape == (B, O), logits.shape
    assert jnp.allclose(logits, ref, rtol=1e-3, atol=1e-3), (logits, ref)

    print("KERNEL_OK")
</pallas_src>

<mosaic_0001>
module attributes {stable_mosaic.version = 11 : i64} {
  func.func @_gru_kernel(%arg0: i32, %arg1: memref<1x8x4x32xf32, #tpu.memory_space<vmem>>, %arg2: memref<1x8x4x32xf32, #tpu.memory_space<vmem>>, %arg3: memref<1x8x4x32xf32, #tpu.memory_space<vmem>>, %arg4: memref<1x3x32x32xf32, #tpu.memory_space<vmem>>, %arg5: memref<1x1x32xf32, #tpu.memory_space<vmem>>, %arg6: memref<1x4x32xf32, #tpu.memory_space<vmem>>) attributes {dimension_semantics = [#tpu.dimension_semantics<parallel>], iteration_bounds = array<i64: 2>, scalar_prefetch = 0 : i64, scratch_operands = 0 : i64, tpu.core_type = #tpu.core_type<tc>, window_params = [{transform_indices = @transform_0, window_bounds = array<i64: 1, 8, 4, 32>}, {transform_indices = @transform_1, window_bounds = array<i64: 1, 8, 4, 32>}, {transform_indices = @transform_2, window_bounds = array<i64: 1, 8, 4, 32>}, {transform_indices = @transform_3, window_bounds = array<i64: 1, 3, 32, 32>}, {transform_indices = @transform_4, window_bounds = array<i64: 1, 1, 32>}, {transform_indices = @transform_5, window_bounds = array<i64: 1, 4, 32>}]} {
    %c0 = arith.constant 0 : index
    %c0_0 = arith.constant 0 : index
    %c0_1 = arith.constant 0 : index
    %c0_2 = arith.constant 0 : index
    %0 = vector.load %arg4[%c0, %c0_0, %c0_1, %c0_2] : memref<1x3x32x32xf32, #tpu.memory_space<vmem>>, vector<1x1x32x32xf32>
    %1 = vector.shape_cast %0 : vector<1x1x32x32xf32> to vector<32x32xf32>
    %c0_3 = arith.constant 0 : index
    %c1 = arith.constant 1 : index
    %c0_4 = arith.constant 0 : index
    %c0_5 = arith.constant 0 : index
    %2 = vector.load %arg4[%c0_3, %c1, %c0_4, %c0_5] : memref<1x3x32x32xf32, #tpu.memory_space<vmem>>, vector<1x1x32x32xf32>
    %3 = vector.shape_cast %2 : vector<1x1x32x32xf32> to vector<32x32xf32>
    %c0_6 = arith.constant 0 : index
    %c2 = arith.constant 2 : index
    %c0_7 = arith.constant 0 : index
    %c0_8 = arith.constant 0 : index
    %4 = vector.load %arg4[%c0_6, %c2, %c0_7, %c0_8] : memref<1x3x32x32xf32, #tpu.memory_space<vmem>>, vector<1x1x32x32xf32>
    %5 = vector.shape_cast %4 : vector<1x1x32x32xf32> to vector<32x32xf32>
    %c0_9 = arith.constant 0 : index
    %c0_10 = arith.constant 0 : index
    %c0_11 = arith.constant 0 : index
    %6 = vector.load %arg5[%c0_9, %c0_10, %c0_11] : memref<1x1x32xf32, #tpu.memory_space<vmem>>, vector<1x1x32xf32>
    %7 = vector.shape_cast %6 : vector<1x1x32xf32> to vector<1x32xf32>
    %cst = arith.constant 0.000000e+00 : f32
    %8 = vector.broadcast %cst : f32 to vector<4x32xf32>
    %c0_i32 = arith.constant 0 : i32
    %c7_i32 = arith.constant 7 : i32
    %9 = arith.muli %arg0, %c7_i32 : i32
    %c2_i32 = arith.constant 2 : i32
    %10 = arith.muli %c2_i32, %arg0 : i32
    %c1_i32 = arith.constant 1 : i32
    %11 = arith.subi %c1_i32, %10 : i32
    %12 = arith.muli %11, %c0_i32 : i32
    %13 = arith.addi %9, %12 : i32
    %c0_12 = arith.constant 0 : index
    %14 = arith.index_cast %13 : i32 to index
    %c0_13 = arith.constant 0 : index
    %c0_14 = arith.constant 0 : index
    %15 = vector.load %arg1[%c0_12, %14, %c0_13, %c0_14] : memref<1x8x4x32xf32, #tpu.memory_space<vmem>>, vector<1x1x4x32xf32>
    %16 = vector.shape_cast %15 : vector<1x1x4x32xf32> to vector<4x32xf32>
    %c0_15 = arith.constant 0 : index
    %17 = arith.index_cast %13 : i32 to index
    %c0_16 = arith.constant 0 : index
    %c0_17 = arith.constant 0 : index
    %18 = vector.load %arg2[%c0_15, %17, %c0_16, %c0_17] : memref<1x8x4x32xf32, #tpu.memory_space<vmem>>, vector<1x1x4x32xf32>
    %19 = vector.shape_cast %18 : vector<1x1x4x32xf32> to vector<4x32xf32>
    %c0_18 = arith.constant 0 : index
    %20 = arith.index_cast %13 : i32 to index
    %c0_19 = arith.constant 0 : index
    %c0_20 = arith.constant 0 : index
    %21 = vector.load %arg3[%c0_18, %20, %c0_19, %c0_20] : memref<1x8x4x32xf32, #tpu.memory_space<vmem>>, vector<1x1x4x32xf32>
    %22 = vector.shape_cast %21 : vector<1x1x4x32xf32> to vector<4x32xf32>
    %cst_21 = arith.constant dense<0.000000e+00> : vector<4x32xf32>
    %23 = tpu.matmul %8, %1, %cst_21 {dimension_numbers = #tpu.dot_dimension_numbers<[1], [0], [0], [1], [0, 0, 1, 1], [], []>} : vector<4x32xf32>, vector<32x32xf32>, vector<4x32xf32> -> vector<4x32xf32>
    %24 = arith.addf %16, %23 : vector<4x32xf32>
    %25 = arith.negf %24 : vector<4x32xf32>
    %26 = math.exp %25 : vector<4x32xf32>
    %cst_22 = arith.constant 1.000000e+00 : f32
    %27 = vector.broadcast %cst_22 : f32 to vector<4x32xf32>
    %28 = arith.addf %27, %26 : vector<4x32xf32>
    %29 = arith.divf %27, %28 : vector<4x32xf32>
    %cst_23 = arith.constant dense<0.000000e+00> : vector<4x32xf32>
    %30 = tpu.matmul %8, %3, %cst_23 {dimension_numbers = #tpu.dot_dimension_numbers<[1], [0], [0], [1], [0, 0, 1, 1], [], []>} : vector<4x32xf32>, vector<32x32xf32>, vector<4x32xf32> -> vector<4x32xf32>
    %31 = arith.addf %19, %30 : vector<4x32xf32>
    %32 = arith.negf %31 : vector<4x32xf32>
    %33 = math.exp %32 : vector<4x32xf32>
    %cst_24 = arith.constant 1.000000e+00 : f32
    %34 = vector.broadcast %cst_24 : f32 to vector<4x32xf32>
    %35 = arith.addf %34, %33 : vector<4x32xf32>
    %36 = arith.divf %34, %35 : vector<4x32xf32>
    %cst_25 = arith.constant dense<0.000000e+00> : vector<4x32xf32>
    %37 = tpu.matmul %8, %5, %cst_25 {dimension_numbers = #tpu.dot_dimension_numbers<[1], [0], [0], [1], [0, 0, 1, 1], [], []>} : vector<4x32xf32>, vector<32x32xf32>, vector<4x32xf32> -> vector<4x32xf32>
    %38 = vector.broadcast %7 : vector<1x32xf32> to vector<4x32xf32>
    %39 = arith.addf %37, %38 : vector<4x32xf32>
    %40 = arith.mulf %29, %39 : vector<4x32xf32>
    %41 = arith.addf %22, %40 : vector<4x32xf32>
    %42 = math.tanh %41 : vector<4x32xf32>
    %cst_26 = arith.constant 1.000000e+00 : f32
    %43 = vector.broadcast %cst_26 : f32 to vector<4x32xf32>
    %44 = arith.subf %43, %36 : vector<4x32xf32>
    %45 = arith.mulf %44, %42 : vector<4x32xf32>
    %46 = arith.mulf %36, %8 : vector<4x32xf32>
    %47 = arith.addf %45, %46 : vector<4x32xf32>
    %c1_i32_27 = arith.constant 1 : i32
    %c7_i32_28 = arith.constant 7 : i32
    %48 = arith.muli %arg0, %c7_i32_28 : i32
    %c2_i32_29 = arith.constant 2 : i32
    %49 = arith.muli %c2_i32_29, %arg0 : i32
    %c1_i32_30 = arith.constant 1 : i32
    %50 = arith.subi %c1_i32_30, %49 : i32
    %51 = arith.muli %50, %c1_i32_27 : i32
    %52 = arith.addi %48, %51 : i32
    %c0_31 = arith.constant 0 : index
    %53 = arith.index_cast %52 : i32 to index
    %c0_32 = arith.constant 0 : index
    %c0_33 = arith.constant 0 : index
    %54 = vector.load %arg1[%c0_31, %53, %c0_32, %c0_33] : memref<1x8x4x32xf32, #tpu.memory_space<vmem>>, vector<1x1x4x32xf32>
    %55 = vector.shape_cast %54 : vector<1x1x4x32xf32> to vector<4x32xf32>
    %c0_34 = arith.constant 0 : index
    %56 = arith.index_cast %52 : i32 to index
    %c0_35 = arith.constant 0 : index
    %c0_36 = arith.constant 0 : index
    %57 = vector.load %arg2[%c0_34, %56, %c0_35, %c0_36] : memref<1x8x4x32xf32, #tpu.memory_space<vmem>>, vector<1x1x4x32xf32>
    %58 = vector.shape_cast %57 : vector<1x1x4x32xf32> to vector<4x32xf32>
    %c0_37 = arith.constant 0 : index
    %59 = arith.index_cast %52 : i32 to index
    %c0_38 = arith.constant 0 : index
    %c0_39 = arith.constant 0 : index
    %60 = vector.load %arg3[%c0_37, %59, %c0_38, %c0_39] : memref<1x8x4x32xf32, #tpu.memory_space<vmem>>, vector<1x1x4x32xf32>
    %61 = vector.shape_cast %60 : vector<1x1x4x32xf32> to vector<4x32xf32>
    %cst_40 = arith.constant dense<0.000000e+00> : vector<4x32xf32>
    %62 = tpu.matmul %47, %1, %cst_40 {dimension_numbers = #tpu.dot_dimension_numbers<[1], [0], [0], [1], [0, 0, 1, 1], [], []>} : vector<4x32xf32>, vector<32x32xf32>, vector<4x32xf32> -> vector<4x32xf32>
    %63 = arith.addf %55, %62 : vector<4x32xf32>
    %64 = arith.negf %63 : vector<4x32xf32>
    %65 = math.exp %64 : vector<4x32xf32>
    %cst_41 = arith.constant 1.000000e+00 : f32
    %66 = vector.broadcast %cst_41 : f32 to vector<4x32xf32>
    %67 = arith.addf %66, %65 : vector<4x32xf32>
    %68 = arith.divf %66, %67 : vector<4x32xf32>
    %cst_42 = arith.constant dense<0.000000e+00> : vector<4x32xf32>
    %69 = tpu.matmul %47, %3, %cst_42 {dimension_numbers = #tpu.dot_dimension_numbers<[1], [0], [0], [1], [0, 0, 1, 1], [], []>} : vector<4x32xf32>, vector<32x32xf32>, vector<4x32xf32> -> vector<4x32xf32>
    %70 = arith.addf %58, %69 : vector<4x32xf32>
    %71 = arith.negf %70 : vector<4x32xf32>
    %72 = math.exp %71 : vector<4x32xf32>
    %cst_43 = arith.constant 1.000000e+00 : f32
    %73 = vector.broadcast %cst_43 : f32 to vector<4x32xf32>
    %74 = arith.addf %73, %72 : vector<4x32xf32>
    %75 = arith.divf %73, %74 : vector<4x32xf32>
    %cst_44 = arith.constant dense<0.000000e+00> : vector<4x32xf32>
    %76 = tpu.matmul %47, %5, %cst_44 {dimension_numbers = #tpu.dot_dimension_numbers<[1], [0], [0], [1], [0, 0, 1, 1], [], []>} : vector<4x32xf32>, vector<32x32xf32>, vector<4x32xf32> -> vector<4x32xf32>
    %77 = vector.broadcast %7 : vector<1x32xf32> to vector<4x32xf32>
    %78 = arith.addf %76, %77 : vector<4x32xf32>
    %79 = arith.mulf %68, %78 : vector<4x32xf32>
    %80 = arith.addf %61, %79 : vector<4x32xf32>
    %81 = math.tanh %80 : vector<4x32xf32>
    %cst_45 = arith.constant 1.000000e+00 : f32
    %82 = vector.broadcast %cst_45 : f32 to vector<4x32xf32>
    %83 = arith.subf %82, %75 : vector<4x32xf32>
    %84 = arith.mulf %83, %81 : vector<4x32xf32>
    %85 = arith.mulf %75, %47 : vector<4x32xf32>
    %86 = arith.addf %84, %85 : vector<4x32xf32>
    %c2_i32_46 = arith.constant 2 : i32
    %c7_i32_47 = arith.constant 7 : i32
    %87 = arith.muli %arg0, %c7_i32_47 : i32
    %c2_i32_48 = arith.constant 2 : i32
    %88 = arith.muli %c2_i32_48, %arg0 : i32
    %c1_i32_49 = arith.constant 1 : i32
    %89 = arith.subi %c1_i32_49, %88 : i32
    %90 = arith.muli %89, %c2_i32_46 : i32
    %91 = arith.addi %87, %90 : i32
    %c0_50 = arith.constant 0 : index
    %92 = arith.index_cast %91 : i32 to index
    %c0_51 = arith.constant 0 : index
    %c0_52 = arith.constant 0 : index
    %93 = vector.load %arg1[%c0_50, %92, %c0_51, %c0_52] : memref<1x8x4x32xf32, #tpu.memory_space<vmem>>, vector<1x1x4x32xf32>
    %94 = vector.shape_cast %93 : vector<1x1x4x32xf32> to vector<4x32xf32>
    %c0_53 = arith.constant 0 : index
    %95 = arith.index_cast %91 : i32 to index
    %c0_54 = arith.constant 0 : index
    %c0_55 = arith.constant 0 : index
    %96 = vector.load %arg2[%c0_53, %95, %c0_54, %c0_55] : memref<1x8x4x32xf32, #tpu.memory_space<vmem>>, vector<1x1x4x32xf32>
    %97 = vector.shape_cast %96 : vector<1x1x4x32xf32> to vector<4x32xf32>
    %c0_56 = arith.constant 0 : index
    %98 = arith.index_cast %91 : i32 to index
    %c0_57 = arith.constant 0 : index
    %c0_58 = arith.constant 0 : index
    %99 = vector.load %arg3[%c0_56, %98, %c0_57, %c0_58] : memref<1x8x4x32xf32, #tpu.memory_space<vmem>>, vector<1x1x4x32xf32>
    %100 = vector.shape_cast %99 : vector<1x1x4x32xf32> to vector<4x32xf32>
    %cst_59 = arith.constant dense<0.000000e+00> : vector<4x32xf32>
    %101 = tpu.matmul %86, %1, %cst_59 {dimension_numbers = #tpu.dot_dimension_numbers<[1], [0], [0], [1], [0, 0, 1, 1], [], []>} : vector<4x32xf32>, vector<32x32xf32>, vector<4x32xf32> -> vector<4x32xf32>
    %102 = arith.addf %94, %101 : vector<4x32xf32>
    %103 = arith.negf %102 : vector<4x32xf32>
    %104 = math.exp %103 : vector<4x32xf32>
    %cst_60 = arith.constant 1.000000e+00 : f32
    %105 = vector.broadcast %cst_60 : f32 to vector<4x32xf32>
    %106 = arith.addf %105, %104 : vector<4x32xf32>
    %107 = arith.divf %105, %106 : vector<4x32xf32>
    %cst_61 = arith.constant dense<0.000000e+00> : vector<4x32xf32>
    %108 = tpu.matmul %86, %3, %cst_61 {dimension_numbers = #tpu.dot_dimension_numbers<[1], [0], [0], [1], [0, 0, 1, 1], [], []>} : vector<4x32xf32>, vector<32x32xf32>, vector<4x32xf32> -> vector<4x32xf32>
    %109 = arith.addf %97, %108 : vector<4x32xf32>
    %110 = arith.negf %109 : vector<4x32xf32>
    %111 = math.exp %110 : vector<4x32xf32>
    %cst_62 = arith.constant 1.000000e+00 : f32
    %112 = vector.broadcast %cst_62 : f32 to vector<4x32xf32>
    %113 = arith.addf %112, %111 : vector<4x32xf32>
    %114 = arith.divf %112, %113 : vector<4x32xf32>
    %cst_63 = arith.constant dense<0.000000e+00> : vector<4x32xf32>
    %115 = tpu.matmul %86, %5, %cst_63 {dimension_numbers = #tpu.dot_dimension_numbers<[1], [0], [0], [1], [0, 0, 1, 1], [], []>} : vector<4x32xf32>, vector<32x32xf32>, vector<4x32xf32> -> vector<4x32xf32>
    %116 = vector.broadcast %7 : vector<1x32xf32> to vector<4x32xf32>
    %117 = arith.addf %115, %116 : vector<4x32xf32>
    %118 = arith.mulf %107, %117 : vector<4x32xf32>
    %119 = arith.addf %100, %118 : vector<4x32xf32>
    %120 = math.tanh %119 : vector<4x32xf32>
    %cst_64 = arith.constant 1.000000e+00 : f32
    %121 = vector.broadcast %cst_64 : f32 to vector<4x32xf32>
    %122 = arith.subf %121, %114 : vector<4x32xf32>
    %123 = arith.mulf %122, %120 : vector<4x32xf32>
    %124 = arith.mulf %114, %86 : vector<4x32xf32>
    %125 = arith.addf %123, %124 : vector<4x32xf32>
    %c3_i32 = arith.constant 3 : i32
    %c7_i32_65 = arith.constant 7 : i32
    %126 = arith.muli %arg0, %c7_i32_65 : i32
    %c2_i32_66 = arith.constant 2 : i32
    %127 = arith.muli %c2_i32_66, %arg0 : i32
    %c1_i32_67 = arith.constant 1 : i32
    %128 = arith.subi %c1_i32_67, %127 : i32
    %129 = arith.muli %128, %c3_i32 : i32
    %130 = arith.addi %126, %129 : i32
    %c0_68 = arith.constant 0 : index
    %131 = arith.index_cast %130 : i32 to index
    %c0_69 = arith.constant 0 : index
    %c0_70 = arith.constant 0 : index
    %132 = vector.load %arg1[%c0_68, %131, %c0_69, %c0_70] : memref<1x8x4x32xf32, #tpu.memory_space<vmem>>, vector<1x1x4x32xf32>
    %133 = vector.shape_cast %132 : vector<1x1x4x32xf32> to vector<4x32xf32>
    %c0_71 = arith.constant 0 : index
    %134 = arith.index_cast %130 : i32 to index
    %c0_72 = arith.constant 0 : index
    %c0_73 = arith.constant 0 : index
    %135 = vector.load %arg2[%c0_71, %134, %c0_72, %c0_73] : memref<1x8x4x32xf32, #tpu.memory_space<vmem>>, vector<1x1x4x32xf32>
    %136 = vector.shape_cast %135 : vector<1x1x4x32xf32> to vector<4x32xf32>
    %c0_74 = arith.constant 0 : index
    %137 = arith.index_cast %130 : i32 to index
    %c0_75 = arith.constant 0 : index
    %c0_76 = arith.constant 0 : index
    %138 = vector.load %arg3[%c0_74, %137, %c0_75, %c0_76] : memref<1x8x4x32xf32, #tpu.memory_space<vmem>>, vector<1x1x4x32xf32>
    %139 = vector.shape_cast %138 : vector<1x1x4x32xf32> to vector<4x32xf32>
    %cst_77 = arith.constant dense<0.000000e+00> : vector<4x32xf32>
    %140 = tpu.matmul %125, %1, %cst_77 {dimension_numbers = #tpu.dot_dimension_numbers<[1], [0], [0], [1], [0, 0, 1, 1], [], []>} : vector<4x32xf32>, vector<32x32xf32>, vector<4x32xf32> -> vector<4x32xf32>
    %141 = arith.addf %133, %140 : vector<4x32xf32>
    %142 = arith.negf %141 : vector<4x32xf32>
    %143 = math.exp %142 : vector<4x32xf32>
    %cst_78 = arith.constant 1.000000e+00 : f32
    %144 = vector.broadcast %cst_78 : f32 to vector<4x32xf32>
    %145 = arith.addf %144, %143 : vector<4x32xf32>
    %146 = arith.divf %144, %145 : vector<4x32xf32>
    %cst_79 = arith.constant dense<0.000000e+00> : vector<4x32xf32>
    %147 = tpu.matmul %125, %3, %cst_79 {dimension_numbers = #tpu.dot_dimension_numbers<[1], [0], [0], [1], [0, 0, 1, 1], [], []>} : vector<4x32xf32>, vector<32x32xf32>, vector<4x32xf32> -> vector<4x32xf32>
    %148 = arith.addf %136, %147 : vector<4x32xf32>
    %149 = arith.negf %148 : vector<4x32xf32>
    %150 = math.exp %149 : vector<4x32xf32>
    %cst_80 = arith.constant 1.000000e+00 : f32
    %151 = vector.broadcast %cst_80 : f32 to vector<4x32xf32>
    %152 = arith.addf %151, %150 : vector<4x32xf32>
    %153 = arith.divf %151, %152 : vector<4x32xf32>
    %cst_81 = arith.constant dense<0.000000e+00> : vector<4x32xf32>
    %154 = tpu.matmul %125, %5, %cst_81 {dimension_numbers = #tpu.dot_dimension_numbers<[1], [0], [0], [1], [0, 0, 1, 1], [], []>} : vector<4x32xf32>, vector<32x32xf32>, vector<4x32xf32> -> vector<4x32xf32>
    %155 = vector.broadcast %7 : vector<1x32xf32> to vector<4x32xf32>
    %156 = arith.addf %154, %155 : vector<4x32xf32>
    %157 = arith.mulf %146, %156 : vector<4x32xf32>
    %158 = arith.addf %139, %157 : vector<4x32xf32>
    %159 = math.tanh %158 : vector<4x32xf32>
    %cst_82 = arith.constant 1.000000e+00 : f32
    %160 = vector.broadcast %cst_82 : f32 to vector<4x32xf32>
    %161 = arith.subf %160, %153 : vector<4x32xf32>
    %162 = arith.mulf %161, %159 : vector<4x32xf32>
    %163 = arith.mulf %153, %125 : vector<4x32xf32>
    %164 = arith.addf %162, %163 : vector<4x32xf32>
    %c4_i32 = arith.constant 4 : i32
    %c7_i32_83 = arith.constant 7 : i32
    %165 = arith.muli %arg0, %c7_i32_83 : i32
    %c2_i32_84 = arith.constant 2 : i32
    %166 = arith.muli %c2_i32_84, %arg0 : i32
    %c1_i32_85 = arith.constant 1 : i32
    %167 = arith.subi %c1_i32_85, %166 : i32
    %168 = arith.muli %167, %c4_i32 : i32
    %169 = arith.addi %165, %168 : i32
    %c0_86 = arith.constant 0 : index
    %170 = arith.index_cast %169 : i32 to index
    %c0_87 = arith.constant 0 : index
    %c0_88 = arith.constant 0 : index
    %171 = vector.load %arg1[%c0_86, %170, %c0_87, %c0_88] : memref<1x8x4x32xf32, #tpu.memory_space<vmem>>, vector<1x1x4x32xf32>
    %172 = vector.shape_cast %171 : vector<1x1x4x32xf32> to vector<4x32xf32>
    %c0_89 = arith.constant 0 : index
    %173 = arith.index_cast %169 : i32 to index
    %c0_90 = arith.constant 0 : index
    %c0_91 = arith.constant 0 : index
    %174 = vector.load %arg2[%c0_89, %173, %c0_90, %c0_91] : memref<1x8x4x32xf32, #tpu.memory_space<vmem>>, vector<1x1x4x32xf32>
    %175 = vector.shape_cast %174 : vector<1x1x4x32xf32> to vector<4x32xf32>
    %c0_92 = arith.constant 0 : index
    %176 = arith.index_cast %169 : i32 to index
    %c0_93 = arith.constant 0 : index
    %c0_94 = arith.constant 0 : index
    %177 = vector.load %arg3[%c0_92, %176, %c0_93, %c0_94] : memref<1x8x4x32xf32, #tpu.memory_space<vmem>>, vector<1x1x4x32xf32>
    %178 = vector.shape_cast %177 : vector<1x1x4x32xf32> to vector<4x32xf32>
    %cst_95 = arith.constant dense<0.000000e+00> : vector<4x32xf32>
    %179 = tpu.matmul %164, %1, %cst_95 {dimension_numbers = #tpu.dot_dimension_numbers<[1], [0], [0], [1], [0, 0, 1, 1], [], []>} : vector<4x32xf32>, vector<32x32xf32>, vector<4x32xf32> -> vector<4x32xf32>
    %180 = arith.addf %172, %179 : vector<4x32xf32>
    %181 = arith.negf %180 : vector<4x32xf32>
    %182 = math.exp %181 : vector<4x32xf32>
    %cst_96 = arith.constant 1.000000e+00 : f32
    %183 = vector.broadcast %cst_96 : f32 to vector<4x32xf32>
    %184 = arith.addf %183, %182 : vector<4x32xf32>
    %185 = arith.divf %183, %184 : vector<4x32xf32>
    %cst_97 = arith.constant dense<0.000000e+00> : vector<4x32xf32>
    %186 = tpu.matmul %164, %3, %cst_97 {dimension_numbers = #tpu.dot_dimension_numbers<[1], [0], [0], [1], [0, 0, 1, 1], [], []>} : vector<4x32xf32>, vector<32x32xf32>, vector<4x32xf32> -> vector<4x32xf32>
    %187 = arith.addf %175, %186 : vector<4x32xf32>
    %188 = arith.negf %187 : vector<4x32xf32>
    %189 = math.exp %188 : vector<4x32xf32>
    %cst_98 = arith.constant 1.000000e+00 : f32
    %190 = vector.broadcast %cst_98 : f32 to vector<4x32xf32>
    %191 = arith.addf %190, %189 : vector<4x32xf32>
    %192 = arith.divf %190, %191 : vector<4x32xf32>
    %cst_99 = arith.constant dense<0.000000e+00> : vector<4x32xf32>
    %193 = tpu.matmul %164, %5, %cst_99 {dimension_numbers = #tpu.dot_dimension_numbers<[1], [0], [0], [1], [0, 0, 1, 1], [], []>} : vector<4x32xf32>, vector<32x32xf32>, vector<4x32xf32> -> vector<4x32xf32>
    %194 = vector.broadcast %7 : vector<1x32xf32> to vector<4x32xf32>
    %195 = arith.addf %193, %194 : vector<4x32xf32>
    %196 = arith.mulf %185, %195 : vector<4x32xf32>
    %197 = arith.addf %178, %196 : vector<4x32xf32>
    %198 = math.tanh %197 : vector<4x32xf32>
    %cst_100 = arith.constant 1.000000e+00 : f32
    %199 = vector.broadcast %cst_100 : f32 to vector<4x32xf32>
    %200 = arith.subf %199, %192 : vector<4x32xf32>
    %201 = arith.mulf %200, %198 : vector<4x32xf32>
    %202 = arith.mulf %192, %164 : vector<4x32xf32>
    %203 = arith.addf %201, %202 : vector<4x32xf32>
    %c5_i32 = arith.constant 5 : i32
    %c7_i32_101 = arith.constant 7 : i32
    %204 = arith.muli %arg0, %c7_i32_101 : i32
    %c2_i32_102 = arith.constant 2 : i32
    %205 = arith.muli %c2_i32_102, %arg0 : i32
    %c1_i32_103 = arith.constant 1 : i32
    %206 = arith.subi %c1_i32_103, %205 : i32
    %207 = arith.muli %206, %c5_i32 : i32
    %208 = arith.addi %204, %207 : i32
    %c0_104 = arith.constant 0 : index
    %209 = arith.index_cast %208 : i32 to index
    %c0_105 = arith.constant 0 : index
    %c0_106 = arith.constant 0 : index
    %210 = vector.load %arg1[%c0_104, %209, %c0_105, %c0_106] : memref<1x8x4x32xf32, #tpu.memory_space<vmem>>, vector<1x1x4x32xf32>
    %211 = vector.shape_cast %210 : vector<1x1x4x32xf32> to vector<4x32xf32>
    %c0_107 = arith.constant 0 : index
    %212 = arith.index_cast %208 : i32 to index
    %c0_108 = arith.constant 0 : index
    %c0_109 = arith.constant 0 : index
    %213 = vector.load %arg2[%c0_107, %212, %c0_108, %c0_109] : memref<1x8x4x32xf32, #tpu.memory_space<vmem>>, vector<1x1x4x32xf32>
    %214 = vector.shape_cast %213 : vector<1x1x4x32xf32> to vector<4x32xf32>
    %c0_110 = arith.constant 0 : index
    %215 = arith.index_cast %208 : i32 to index
    %c0_111 = arith.constant 0 : index
    %c0_112 = arith.constant 0 : index
    %216 = vector.load %arg3[%c0_110, %215, %c0_111, %c0_112] : memref<1x8x4x32xf32, #tpu.memory_space<vmem>>, vector<1x1x4x32xf32>
    %217 = vector.shape_cast %216 : vector<1x1x4x32xf32> to vector<4x32xf32>
    %cst_113 = arith.constant dense<0.000000e+00> : vector<4x32xf32>
    %218 = tpu.matmul %203, %1, %cst_113 {dimension_numbers = #tpu.dot_dimension_numbers<[1], [0], [0], [1], [0, 0, 1, 1], [], []>} : vector<4x32xf32>, vector<32x32xf32>, vector<4x32xf32> -> vector<4x32xf32>
    %219 = arith.addf %211, %218 : vector<4x32xf32>
    %220 = arith.negf %219 : vector<4x32xf32>
    %221 = math.exp %220 : vector<4x32xf32>
    %cst_114 = arith.constant 1.000000e+00 : f32
    %222 = vector.broadcast %cst_114 : f32 to vector<4x32xf32>
    %223 = arith.addf %222, %221 : vector<4x32xf32>
    %224 = arith.divf %222, %223 : vector<4x32xf32>
    %cst_115 = arith.constant dense<0.000000e+00> : vector<4x32xf32>
    %225 = tpu.matmul %203, %3, %cst_115 {dimension_numbers = #tpu.dot_dimension_numbers<[1], [0], [0], [1], [0, 0, 1, 1], [], []>} : vector<4x32xf32>, vector<32x32xf32>, vector<4x32xf32> -> vector<4x32xf32>
    %226 = arith.addf %214, %225 : vector<4x32xf32>
    %227 = arith.negf %226 : vector<4x32xf32>
    %228 = math.exp %227 : vector<4x32xf32>
    %cst_116 = arith.constant 1.000000e+00 : f32
    %229 = vector.broadcast %cst_116 : f32 to vector<4x32xf32>
    %230 = arith.addf %229, %228 : vector<4x32xf32>
    %231 = arith.divf %229, %230 : vector<4x32xf32>
    %cst_117 = arith.constant dense<0.000000e+00> : vector<4x32xf32>
    %232 = tpu.matmul %203, %5, %cst_117 {dimension_numbers = #tpu.dot_dimension_numbers<[1], [0], [0], [1], [0, 0, 1, 1], [], []>} : vector<4x32xf32>, vector<32x32xf32>, vector<4x32xf32> -> vector<4x32xf32>
    %233 = vector.broadcast %7 : vector<1x32xf32> to vector<4x32xf32>
    %234 = arith.addf %232, %233 : vector<4x32xf32>
    %235 = arith.mulf %224, %234 : vector<4x32xf32>
    %236 = arith.addf %217, %235 : vector<4x32xf32>
    %237 = math.tanh %236 : vector<4x32xf32>
    %cst_118 = arith.constant 1.000000e+00 : f32
    %238 = vector.broadcast %cst_118 : f32 to vector<4x32xf32>
    %239 = arith.subf %238, %231 : vector<4x32xf32>
    %240 = arith.mulf %239, %237 : vector<4x32xf32>
    %241 = arith.mulf %231, %203 : vector<4x32xf32>
    %242 = arith.addf %240, %241 : vector<4x32xf32>
    %c6_i32 = arith.constant 6 : i32
    %c7_i32_119 = arith.constant 7 : i32
    %243 = arith.muli %arg0, %c7_i32_119 : i32
    %c2_i32_120 = arith.constant 2 : i32
    %244 = arith.muli %c2_i32_120, %arg0 : i32
    %c1_i32_121 = arith.constant 1 : i32
    %245 = arith.subi %c1_i32_121, %244 : i32
    %246 = arith.muli %245, %c6_i32 : i32
    %247 = arith.addi %243, %246 : i32
    %c0_122 = arith.constant 0 : index
    %248 = arith.index_cast %247 : i32 to index
    %c0_123 = arith.constant 0 : index
    %c0_124 = arith.constant 0 : index
    %249 = vector.load %arg1[%c0_122, %248, %c0_123, %c0_124] : memref<1x8x4x32xf32, #tpu.memory_space<vmem>>, vector<1x1x4x32xf32>
    %250 = vector.shape_cast %249 : vector<1x1x4x32xf32> to vector<4x32xf32>
    %c0_125 = arith.constant 0 : index
    %251 = arith.index_cast %247 : i32 to index
    %c0_126 = arith.constant 0 : index
    %c0_127 = arith.constant 0 : index
    %252 = vector.load %arg2[%c0_125, %251, %c0_126, %c0_127] : memref<1x8x4x32xf32, #tpu.memory_space<vmem>>, vector<1x1x4x32xf32>
    %253 = vector.shape_cast %252 : vector<1x1x4x32xf32> to vector<4x32xf32>
    %c0_128 = arith.constant 0 : index
    %254 = arith.index_cast %247 : i32 to index
    %c0_129 = arith.constant 0 : index
    %c0_130 = arith.constant 0 : index
    %255 = vector.load %arg3[%c0_128, %254, %c0_129, %c0_130] : memref<1x8x4x32xf32, #tpu.memory_space<vmem>>, vector<1x1x4x32xf32>
    %256 = vector.shape_cast %255 : vector<1x1x4x32xf32> to vector<4x32xf32>
    %cst_131 = arith.constant dense<0.000000e+00> : vector<4x32xf32>
    %257 = tpu.matmul %242, %1, %cst_131 {dimension_numbers = #tpu.dot_dimension_numbers<[1], [0], [0], [1], [0, 0, 1, 1], [], []>} : vector<4x32xf32>, vector<32x32xf32>, vector<4x32xf32> -> vector<4x32xf32>
    %258 = arith.addf %250, %257 : vector<4x32xf32>
    %259 = arith.negf %258 : vector<4x32xf32>
    %260 = math.exp %259 : vector<4x32xf32>
    %cst_132 = arith.constant 1.000000e+00 : f32
    %261 = vector.broadcast %cst_132 : f32 to vector<4x32xf32>
    %262 = arith.addf %261, %260 : vector<4x32xf32>
    %263 = arith.divf %261, %262 : vector<4x32xf32>
    %cst_133 = arith.constant dense<0.000000e+00> : vector<4x32xf32>
    %264 = tpu.matmul %242, %3, %cst_133 {dimension_numbers = #tpu.dot_dimension_numbers<[1], [0], [0], [1], [0, 0, 1, 1], [], []>} : vector<4x32xf32>, vector<32x32xf32>, vector<4x32xf32> -> vector<4x32xf32>
    %265 = arith.addf %253, %264 : vector<4x32xf32>
    %266 = arith.negf %265 : vector<4x32xf32>
    %267 = math.exp %266 : vector<4x32xf32>
    %cst_134 = arith.constant 1.000000e+00 : f32
    %268 = vector.broadcast %cst_134 : f32 to vector<4x32xf32>
    %269 = arith.addf %268, %267 : vector<4x32xf32>
    %270 = arith.divf %268, %269 : vector<4x32xf32>
    %cst_135 = arith.constant dense<0.000000e+00> : vector<4x32xf32>
    %271 = tpu.matmul %242, %5, %cst_135 {dimension_numbers = #tpu.dot_dimension_numbers<[1], [0], [0], [1], [0, 0, 1, 1], [], []>} : vector<4x32xf32>, vector<32x32xf32>, vector<4x32xf32> -> vector<4x32xf32>
    %272 = vector.broadcast %7 : vector<1x32xf32> to vector<4x32xf32>
    %273 = arith.addf %271, %272 : vector<4x32xf32>
    %274 = arith.mulf %263, %273 : vector<4x32xf32>
    %275 = arith.addf %256, %274 : vector<4x32xf32>
    %276 = math.tanh %275 : vector<4x32xf32>
    %cst_136 = arith.constant 1.000000e+00 : f32
    %277 = vector.broadcast %cst_136 : f32 to vector<4x32xf32>
    %278 = arith.subf %277, %270 : vector<4x32xf32>
    %279 = arith.mulf %278, %276 : vector<4x32xf32>
    %280 = arith.mulf %270, %242 : vector<4x32xf32>
    %281 = arith.addf %279, %280 : vector<4x32xf32>
    %c7_i32_137 = arith.constant 7 : i32
    %c7_i32_138 = arith.constant 7 : i32
    %282 = arith.muli %arg0, %c7_i32_138 : i32
    %c2_i32_139 = arith.constant 2 : i32
    %283 = arith.muli %c2_i32_139, %arg0 : i32
    %c1_i32_140 = arith.constant 1 : i32
    %284 = arith.subi %c1_i32_140, %283 : i32
    %285 = arith.muli %284, %c7_i32_137 : i32
    %286 = arith.addi %282, %285 : i32
    %c0_141 = arith.constant 0 : index
    %287 = arith.index_cast %286 : i32 to index
    %c0_142 = arith.constant 0 : index
    %c0_143 = arith.constant 0 : index
    %288 = vector.load %arg1[%c0_141, %287, %c0_142, %c0_143] : memref<1x8x4x32xf32, #tpu.memory_space<vmem>>, vector<1x1x4x32xf32>
    %289 = vector.shape_cast %288 : vector<1x1x4x32xf32> to vector<4x32xf32>
    %c0_144 = arith.constant 0 : index
    %290 = arith.index_cast %286 : i32 to index
    %c0_145 = arith.constant 0 : index
    %c0_146 = arith.constant 0 : index
    %291 = vector.load %arg2[%c0_144, %290, %c0_145, %c0_146] : memref<1x8x4x32xf32, #tpu.memory_space<vmem>>, vector<1x1x4x32xf32>
    %292 = vector.shape_cast %291 : vector<1x1x4x32xf32> to vector<4x32xf32>
    %c0_147 = arith.constant 0 : index
    %293 = arith.index_cast %286 : i32 to index
    %c0_148 = arith.constant 0 : index
    %c0_149 = arith.constant 0 : index
    %294 = vector.load %arg3[%c0_147, %293, %c0_148, %c0_149] : memref<1x8x4x32xf32, #tpu.memory_space<vmem>>, vector<1x1x4x32xf32>
    %295 = vector.shape_cast %294 : vector<1x1x4x32xf32> to vector<4x32xf32>
    %cst_150 = arith.constant dense<0.000000e+00> : vector<4x32xf32>
    %296 = tpu.matmul %281, %1, %cst_150 {dimension_numbers = #tpu.dot_dimension_numbers<[1], [0], [0], [1], [0, 0, 1, 1], [], []>} : vector<4x32xf32>, vector<32x32xf32>, vector<4x32xf32> -> vector<4x32xf32>
    %297 = arith.addf %289, %296 : vector<4x32xf32>
    %298 = arith.negf %297 : vector<4x32xf32>
    %299 = math.exp %298 : vector<4x32xf32>
    %cst_151 = arith.constant 1.000000e+00 : f32
    %300 = vector.broadcast %cst_151 : f32 to vector<4x32xf32>
    %301 = arith.addf %300, %299 : vector<4x32xf32>
    %302 = arith.divf %300, %301 : vector<4x32xf32>
    %cst_152 = arith.constant dense<0.000000e+00> : vector<4x32xf32>
    %303 = tpu.matmul %281, %3, %cst_152 {dimension_numbers = #tpu.dot_dimension_numbers<[1], [0], [0], [1], [0, 0, 1, 1], [], []>} : vector<4x32xf32>, vector<32x32xf32>, vector<4x32xf32> -> vector<4x32xf32>
    %304 = arith.addf %292, %303 : vector<4x32xf32>
    %305 = arith.negf %304 : vector<4x32xf32>
    %306 = math.exp %305 : vector<4x32xf32>
    %cst_153 = arith.constant 1.000000e+00 : f32
    %307 = vector.broadcast %cst_153 : f32 to vector<4x32xf32>
    %308 = arith.addf %307, %306 : vector<4x32xf32>
    %309 = arith.divf %307, %308 : vector<4x32xf32>
    %cst_154 = arith.constant dense<0.000000e+00> : vector<4x32xf32>
    %310 = tpu.matmul %281, %5, %cst_154 {dimension_numbers = #tpu.dot_dimension_numbers<[1], [0], [0], [1], [0, 0, 1, 1], [], []>} : vector<4x32xf32>, vector<32x32xf32>, vector<4x32xf32> -> vector<4x32xf32>
    %311 = vector.broadcast %7 : vector<1x32xf32> to vector<4x32xf32>
    %312 = arith.addf %310, %311 : vector<4x32xf32>
    %313 = arith.mulf %302, %312 : vector<4x32xf32>
    %314 = arith.addf %295, %313 : vector<4x32xf32>
    %315 = math.tanh %314 : vector<4x32xf32>
    %cst_155 = arith.constant 1.000000e+00 : f32
    %316 = vector.broadcast %cst_155 : f32 to vector<4x32xf32>
    %317 = arith.subf %316, %309 : vector<4x32xf32>
    %318 = arith.mulf %317, %315 : vector<4x32xf32>
    %319 = arith.mulf %309, %281 : vector<4x32xf32>
    %320 = arith.addf %318, %319 : vector<4x32xf32>
    %c8_i32 = arith.constant 8 : i32
    %c0_156 = arith.constant 0 : index
    %c0_157 = arith.constant 0 : index
    %c0_158 = arith.constant 0 : index
    %321 = vector.load %arg6[%c0_156, %c0_157, %c0_158] : memref<1x4x32xf32, #tpu.memory_space<vmem>>, vector<1x4x32xf32>
    %322 = vector.shape_cast %321 : vector<1x4x32xf32> to vector<4x32xf32>
    %323 = vector.shape_cast %320 : vector<4x32xf32> to vector<1x4x32xf32>
    tpu.vector_store %arg6[%c0_156, %c0_157, %c0_158], %323 {strides = array<i32>} : memref<1x4x32xf32, #tpu.memory_space<vmem>>, vector<1x4x32xf32>,
    return
  }
  func.func @transform_0(%arg0: i32) -> (i32, i32, i32, i32) {
    %c0_i32 = arith.constant 0 : i32
    %c0_i32_0 = arith.constant 0 : i32
    %c0_i32_1 = arith.constant 0 : i32
    %c0_i32_2 = arith.constant 0 : i32
    return %arg0, %c0_i32, %c0_i32_0, %c0_i32_1 : i32, i32, i32, i32
  }
  func.func @transform_1(%arg0: i32) -> (i32, i32, i32, i32) {
    %c0_i32 = arith.constant 0 : i32
    %c0_i32_0 = arith.constant 0 : i32
    %c0_i32_1 = arith.constant 0 : i32
    %c0_i32_2 = arith.constant 0 : i32
    return %arg0, %c0_i32, %c0_i32_0, %c0_i32_1 : i32, i32, i32, i32
  }
  func.func @transform_2(%arg0: i32) -> (i32, i32, i32, i32) {
    %c0_i32 = arith.constant 0 : i32
    %c0_i32_0 = arith.constant 0 : i32
    %c0_i32_1 = arith.constant 0 : i32
    %c0_i32_2 = arith.constant 0 : i32
    return %arg0, %c0_i32, %c0_i32_0, %c0_i32_1 : i32, i32, i32, i32
  }
  func.func @transform_3(%arg0: i32) -> (i32, i32, i32, i32) {
    %c0_i32 = arith.constant 0 : i32
    %c0_i32_0 = arith.constant 0 : i32
    %c0_i32_1 = arith.constant 0 : i32
    %c0_i32_2 = arith.constant 0 : i32
    return %arg0, %c0_i32, %c0_i32_0, %c0_i32_1 : i32, i32, i32, i32
  }
  func.func @transform_4(%arg0: i32) -> (i32, i32, i32) {
    %c0_i32 = arith.constant 0 : i32
    %c0_i32_0 = arith.constant 0 : i32
    %c0_i32_1 = arith.constant 0 : i32
    return %arg0, %c0_i32, %c0_i32_0 : i32, i32, i32
  }
  func.func @transform_5(%arg0: i32) -> (i32, i32, i32) {
    %c0_i32 = arith.constant 0 : i32
    %c0_i32_0 = arith.constant 0 : i32
    %c0_i32_1 = arith.constant 0 : i32
    return %arg0, %c0_i32, %c0_i32_0 : i32, i32, i32
  }
}

</mosaic_0001>

<llo_original>
// kernel: tpu_custom_call.1
$region0: #{tpu_custom_call.1}
  #allocation0 [shape = 'u32[]', space=smem, size = 0x4, offset = 0x4, fixed_abs, tag = 'smem constant byte address 0x4 - core index']
  #allocation1 [shape = 'u32[72,128]{1,0:T(1,128)}', space=vmem, size = 0x9000, scoped, tag = 'internal scratch']
  %s0 = inlined_call_operand.hbm [shape: f32[2,8,4,32], index: 0, kind: input, shape index: {}]
  %s1 = inlined_call_operand.hbm [shape: f32[2,8,4,32], index: 1, kind: input, shape index: {}]
  %s2 = inlined_call_operand.hbm [shape: f32[2,8,4,32], index: 2, kind: input, shape index: {}]
  %s3 = inlined_call_operand.hbm [shape: f32[2,3,32,32], index: 3, kind: input, shape index: {}]
  %s4 = inlined_call_operand.vmem [shape: f32[2,1,32], index: 4, kind: input, shape index: {}]
  %s5 = inlined_call_operand.hbm [shape: f32[2,4,32], index: 5, kind: output, shape index: {}]
  %s6 = sld [smem:[#allocation0]]
  $region69: #{tpu_custom_call.1} parent=0
    _
  %s8 = ssub.s32 1, %s6
  %s9 = scalar_select 0, %s8, %s6
  $region1: #{tpu_custom_call.1} parent=0
    #allocation2 [shape = 'u8[32768]{0}', space=vmem, size = 0x8000, scoped, tag = 'input window, operand 0']
    #allocation3 [shape = 's32[2]{0}', space=sflag, size = 0x8, scoped, tag = 'scoped memory for tpu_custom_call.1']
    #allocation4 [shape = 's32[2]{0}', space=sflag, size = 0x8, scoped, tag = 'scoped memory for tpu_custom_call.1']
    #allocation5 [shape = 'u8[32768]{0}', space=vmem, size = 0x8000, scoped, tag = 'input window, operand 1']
    #allocation6 [shape = 's32[2]{0}', space=sflag, size = 0x8, scoped, tag = 'scoped memory for tpu_custom_call.1']
    #allocation7 [shape = 'u8[32768]{0}', space=vmem, size = 0x8000, scoped, tag = 'input window, operand 2']
    #allocation8 [shape = 'u8[98304]{0}', space=vmem, size = 0x18000, scoped, tag = 'input window, operand 3']
    #allocation9 [shape = 's32[2]{0}', space=sflag, size = 0x8, scoped, tag = 'scoped memory for tpu_custom_call.1']
    #allocation10 [shape = 'u8[4096]{0}', space=vmem, size = 0x1000, scoped, tag = 'output window, operand 0']
    %10 = vsyncpa [#allocation3], 0
    %s11 = scalar_lea.sflag [#allocation3], 1
    %12 = vsyncpa %s11, 0
    %13 = vsyncpa [#allocation6], 0
    %s14 = scalar_lea.sflag [#allocation6], 1
    %15 = vsyncpa %s14, 0
    %16 = vsyncpa [#allocation9], 0
    %s17 = scalar_lea.sflag [#allocation9], 1
    %18 = vsyncpa %s17, 0
    %19 = vsyncpa [#allocation4], 0
    %s20 = scalar_lea.sflag [#allocation4], 1
    %21 = vsyncpa %s20, 0
    loop: start=0, step=1, limit=4
    $region2: #{tpu_custom_call.1} parent=1 // loop_pre_header
      _
    $region3: #{tpu_custom_call.1} parent=1 // loop_header
      %s23 = sphi 0, %s27
      %p24 = scmp.ge.s32.totalorder %s23, 4
      %s33 = sphi 0, %s35
      %s36 = sphi 0, %s33
      %s37 = sphi 0, %s36
      %s53 = sphi 0, %s37
      %s59 = sphi 0, %s61
      %s62 = sphi 0, %s59
      %s63 = sphi 0, %s62
      %s79 = sphi 0, %s63
      %s85 = sphi 0, %s87
      %s88 = sphi 0, %s85
      %s89 = sphi 0, %s88
      %s105 = sphi 0, %s89
      %s111 = sphi 0, %s113
      %s114 = sphi 0, %s111
      %s115 = sphi 0, %s114
      %s131 = sphi 0, %s115
      %s137 = sphi 0, %s139
      %s140 = sphi 0, %s137
      %s141 = sphi 0, %s140
      %s157 = sphi 0, %s141
      %s163 = sphi 0, %s165
      %s166 = sphi 0, %s163
      %s167 = sphi 0, %s166
      %s183 = sphi 0, %s167
    $region4: #{tpu_custom_call.1} parent=1 // loop_header_branch
      %26 = sbr.rel (%p24) target = $region8
    $region5: #{tpu_custom_call.1} parent=1 // loop_body
      %s28 = ssub.s32 %s23, 1
      %s29 = ssub.s32 %s23, 2
      %s30 = sadd.s32 %s23, 1
      %s31 = ssub.s32 %s23, %s30
      %p32 = scmp.eq.s32.totalorder %s31, 0
      %s34 = sadd.s32 %s33, 1
      %s35 = scalar_select %p32, %s33, %s34
      %p38 = pneg %p32
      %p39 = scmp.eq.s32.totalorder %s23, 1
      %p40 = por %p38, %p39
      %p41 = scmp.ne.s32.totalorder %s33, %s36
      %p42 = scmp.eq.s32.totalorder %s23, 0
      %p43 = por %p41, %p42
      %p44 = scmp.ne.s32.totalorder %s33, %s36
      %p45 = scmp.eq.s32.totalorder %s28, 1
      %p46 = por %p44, %p45
      %p47 = scmp.ne.s32.totalorder %s36, %s37
      %p48 = scmp.eq.s32.totalorder %s28, 0
      %p49 = por %p47, %p48
      %p50 = scmp.ne.s32.totalorder %s36, %s37
      %p51 = scmp.eq.s32.totalorder %s29, 1
      %p52 = por %p50, %p51
      %p54 = scmp.ne.s32.totalorder %s37, %s53
      %p55 = scmp.eq.s32.totalorder %s29, 0
      %p56 = por %p54, %p55
      %s57 = ssub.s32 %s23, %s30
      %p58 = scmp.eq.s32.totalorder %s57, 0
      %s60 = sadd.s32 %s59, 1
      %s61 = scalar_select %p58, %s59, %s60
      %p64 = pneg %p58
      %p65 = scmp.eq.s32.totalorder %s23, 1
      %p66 = por %p64, %p65
      %p67 = scmp.ne.s32.totalorder %s59, %s62
      %p68 = scmp.eq.s32.totalorder %s23, 0
      %p69 = por %p67, %p68
      %p70 = scmp.ne.s32.totalorder %s59, %s62
      %p71 = scmp.eq.s32.totalorder %s28, 1
      %p72 = por %p70, %p71
      %p73 = scmp.ne.s32.totalorder %s62, %s63
      %p74 = scmp.eq.s32.totalorder %s28, 0
      %p75 = por %p73, %p74
      %p76 = scmp.ne.s32.totalorder %s62, %s63
      %p77 = scmp.eq.s32.totalorder %s29, 1
      %p78 = por %p76, %p77
      %p80 = scmp.ne.s32.totalorder %s63, %s79
      %p81 = scmp.eq.s32.totalorder %s29, 0
      %p82 = por %p80, %p81
      %s83 = ssub.s32 %s23, %s30
      %p84 = scmp.eq.s32.totalorder %s83, 0
      %s86 = sadd.s32 %s85, 1
      %s87 = scalar_select %p84, %s85, %s86
      %p90 = pneg %p84
      %p91 = scmp.eq.s32.totalorder %s23, 1
      %p92 = por %p90, %p91
      %p93 = scmp.ne.s32.totalorder %s85, %s88
      %p94 = scmp.eq.s32.totalorder %s23, 0
      %p95 = por %p93, %p94
      %p96 = scmp.ne.s32.totalorder %s85, %s88
      %p97 = scmp.eq.s32.totalorder %s28, 1
      %p98 = por %p96, %p97
      %p99 = scmp.ne.s32.totalorder %s88, %s89
      %p100 = scmp.eq.s32.totalorder %s28, 0
      %p101 = por %p99, %p100
      %p102 = scmp.ne.s32.totalorder %s88, %s89
      %p103 = scmp.eq.s32.totalorder %s29, 1
      %p104 = por %p102, %p103
      %p106 = scmp.ne.s32.totalorder %s89, %s105
      %p107 = scmp.eq.s32.totalorder %s29, 0
      %p108 = por %p106, %p107
      %s109 = ssub.s32 %s23, %s30
      %p110 = scmp.eq.s32.totalorder %s109, 0
      %s112 = sadd.s32 %s111, 1
      %s113 = scalar_select %p110, %s111, %s112
      %p116 = pneg %p110
      %p117 = scmp.eq.s32.totalorder %s23, 1
      %p118 = por %p116, %p117
      %p119 = scmp.ne.s32.totalorder %s111, %s114
      %p120 = scmp.eq.s32.totalorder %s23, 0
      %p121 = por %p119, %p120
      %p122 = scmp.ne.s32.totalorder %s111, %s114
      %p123 = scmp.eq.s32.totalorder %s28, 1
      %p124 = por %p122, %p123
      %p125 = scmp.ne.s32.totalorder %s114, %s115
      %p126 = scmp.eq.s32.totalorder %s28, 0
      %p127 = por %p125, %p126
      %p128 = scmp.ne.s32.totalorder %s114, %s115
      %p129 = scmp.eq.s32.totalorder %s29, 1
      %p130 = por %p128, %p129
      %p132 = scmp.ne.s32.totalorder %s115, %s131
      %p133 = scmp.eq.s32.totalorder %s29, 0
      %p134 = por %p132, %p133
      %s135 = ssub.s32 %s23, %s30
      %p136 = scmp.eq.s32.totalorder %s135, 0
      %s138 = sadd.s32 %s137, 1
      %s139 = scalar_select %p136, %s137, %s138
      %p142 = pneg %p136
      %p143 = scmp.eq.s32.totalorder %s23, 1
      %p144 = por %p142, %p143
      %p145 = scmp.ne.s32.totalorder %s137, %s140
      %p146 = scmp.eq.s32.totalorder %s23, 0
      %p147 = por %p145, %p146
      %p148 = scmp.ne.s32.totalorder %s137, %s140
      %p149 = scmp.eq.s32.totalorder %s28, 1
      %p150 = por %p148, %p149
      %p151 = scmp.ne.s32.totalorder %s140, %s141
      %p152 = scmp.eq.s32.totalorder %s28, 0
      %p153 = por %p151, %p152
      %p154 = scmp.ne.s32.totalorder %s140, %s141
      %p155 = scmp.eq.s32.totalorder %s29, 1
      %p156 = por %p154, %p155
      %p158 = scmp.ne.s32.totalorder %s141, %s157
      %p159 = scmp.eq.s32.totalorder %s29, 0
      %p160 = por %p158, %p159
      %s161 = ssub.s32 %s23, %s30
      %p162 = scmp.eq.s32.totalorder %s161, 0
      %s164 = sadd.s32 %s163, 1
      %s165 = scalar_select %p162, %s163, %s164
      %p168 = pneg %p162
      %p169 = scmp.eq.s32.totalorder %s23, 1
      %p170 = por %p168, %p169
      %p171 = scmp.ne.s32.totalorder %s163, %s166
      %p172 = scmp.eq.s32.totalorder %s23, 0
      %p173 = por %p171, %p172
      %p174 = scmp.ne.s32.totalorder %s163, %s166
      %p175 = scmp.eq.s32.totalorder %s28, 1
      %p176 = por %p174, %p175
      %p177 = scmp.ne.s32.totalorder %s166, %s167
      %p178 = scmp.eq.s32.totalorder %s28, 0
      %p179 = por %p177, %p178
      %p180 = scmp.ne.s32.totalorder %s166, %s167
      %p181 = scmp.eq.s32.totalorder %s29, 1
      %p182 = por %p180, %p181
      %p184 = scmp.ne.s32.totalorder %s167, %s183
      %p185 = scmp.eq.s32.totalorder %s29, 0
      %p186 = por %p184, %p185
      %p187 = scmp.le.s32.totalorder 1, %s23
      %p188 = scmp.lt.s32.totalorder %s23, 3
      %p189 = pnand %p187, %p188
      %p190 = pneg %p189
      // Predicated region
      $region9: #{tpu_custom_call.1} parent=5 // pred_check
        _
      $region10: #{tpu_custom_call.1} parent=5 // pred_check_branch
        %192 = sbr.rel (%p189) target = $region12
      $region11: #{tpu_custom_call.1} parent=5 // pred_region
        %s193 = ssub.s32 %s23, 1
      $region12: #{tpu_custom_call.1} parent=5 // pred_fallthru
        _
      %p194 = scmp.lt.s32.totalorder %s23, 2
      // Predicated region
      $region13: #{tpu_custom_call.1} parent=5 // pred_check
        %p195 = pneg %p194
      $region14: #{tpu_custom_call.1} parent=5 // pred_check_branch
        %197 = sbr.rel (%p195) target = $region16
      $region15: #{tpu_custom_call.1} parent=5 // pred_region
        // Predicated region
        $region17: #{tpu_custom_call.1} parent=15 // pred_check
          %p198 = pneg %p43
        $region18: #{tpu_custom_call.1} parent=15 // pred_check_branch
          %200 = sbr.rel (%p198) target = $region20
        $region19: #{tpu_custom_call.1} parent=15 // pred_region
          %s201 = sand.u32 %s33, 1
          %s202 = scalar_lea.sflag [#allocation3], %s201
          %s203 = sand.u32 %s33, 1
          %s204 = smul.addr %s203, 32
          %s205 = scalar_lea.vmem [#allocation2], %s204
          %207 = vsyncadd %s202, 0
          %s208 = smul.addr %s23, 8
          %s209 = smul.addr %s208, 4
          %s210 = scalar_lea.hbm %s0, %s209
          %s211 = sshll.u32 %s210, 4
          %s212 = int_to_ptr.hbm [resolvable:$true] %s211
          %s213 = sshll.u32 %s205, 4
          %s214 = int_to_ptr.vmem [resolvable:$true] %s213
          %219 = dma.hbm_to_vmem [thread:$0]  %s212, 512, %s214, %s202, 64, 64, 4
        $region20: #{tpu_custom_call.1} parent=15 // pred_fallthru
          _
        // Predicated region
        $region21: #{tpu_custom_call.1} parent=15 // pred_check
          %p220 = pneg %p69
        $region22: #{tpu_custom_call.1} parent=15 // pred_check_branch
          %222 = sbr.rel (%p220) target = $region24
        $region23: #{tpu_custom_call.1} parent=15 // pred_region
          %s223 = sand.u32 %s23, 1
          %s224 = scalar_lea.sflag [#allocation6], %s223
          %s225 = sand.u32 %s59, 1
          %s226 = smul.addr %s225, 32
          %s227 = scalar_lea.vmem [#allocation5], %s226
          %229 = vsyncadd %s224, 0
          %s230 = smul.addr %s23, 8
          %s231 = smul.addr %s230, 4
          %s232 = scalar_lea.hbm %s1, %s231
          %s233 = sshll.u32 %s232, 4
          %s234 = int_to_ptr.hbm [resolvable:$true] %s233
          %s235 = sshll.u32 %s227, 4
          %s236 = int_to_ptr.vmem [resolvable:$true] %s235
          %241 = dma.hbm_to_vmem [thread:$0]  %s234, 512, %s236, %s224, 64, 64, 4
        $region24: #{tpu_custom_call.1} parent=15 // pred_fallthru
          _
        // Predicated region
        $region25: #{tpu_custom_call.1} parent=15 // pred_check
          %p242 = pneg %p95
        $region26: #{tpu_custom_call.1} parent=15 // pred_check_branch
          %244 = sbr.rel (%p242) target = $region28
        $region27: #{tpu_custom_call.1} parent=15 // pred_region
          %s245 = sand.u32 %s23, 1
          %s246 = scalar_lea.sflag [#allocation6], %s245
          %s247 = sand.u32 %s85, 1
          %s248 = smul.addr %s247, 32
          %s249 = scalar_lea.vmem [#allocation7], %s248
          %251 = vsyncadd %s246, 0
          %s252 = smul.addr %s23, 8
          %s253 = smul.addr %s252, 4
          %s254 = scalar_lea.hbm %s2, %s253
          %s255 = sshll.u32 %s254, 4
          %s256 = int_to_ptr.hbm [resolvable:$true] %s255
          %s257 = sshll.u32 %s249, 4
          %s258 = int_to_ptr.vmem [resolvable:$true] %s257
          %263 = dma.hbm_to_vmem [thread:$0]  %s256, 512, %s258, %s246, 64, 64, 4
        $region28: #{tpu_custom_call.1} parent=15 // pred_fallthru
          _
        // Predicated region
        $region29: #{tpu_custom_call.1} parent=15 // pred_check
          %p264 = pneg %p121
        $region30: #{tpu_custom_call.1} parent=15 // pred_check_branch
          %266 = sbr.rel (%p264) target = $region32
        $region31: #{tpu_custom_call.1} parent=15 // pred_region
          %s267 = sand.u32 %s111, 1
          %s268 = scalar_lea.sflag [#allocation9], %s267
          %s269 = sand.u32 %s111, 1
          %s270 = smul.addr %s269, 96
          %s271 = scalar_lea.vmem [#allocation8], %s270
          %273 = vsyncadd %s268, 0
          %s274 = smul.addr %s23, 12
          %s275 = smul.addr %s274, 8
          %s276 = scalar_lea.hbm %s3, %s275
          %s277 = sshll.u32 %s276, 4
          %s278 = int_to_ptr.hbm [resolvable:$true] %s277
          %s279 = sshll.u32 %s271, 4
          %s280 = int_to_ptr.vmem [resolvable:$true] %s279
          %285 = dma.hbm_to_vmem [thread:$0]  %s278, 1536, %s280, %s268, 128, 128, 8
        $region32: #{tpu_custom_call.1} parent=15 // pred_fallthru
          _
        // Predicated region
        $region33: #{tpu_custom_call.1} parent=15 // pred_check
          %p286 = pneg %p147
        $region34: #{tpu_custom_call.1} parent=15 // pred_check_branch
          %288 = sbr.rel (%p286) target = $region36
        $region35: #{tpu_custom_call.1} parent=15 // pred_region
          %p289 = scmp.lt.s32.totalorder %s23, 1
          %s290 = scalar_select %p289, %s23, 1
          %s291 = scalar_lea.vmem %s4, %s290
        $region36: #{tpu_custom_call.1} parent=15 // pred_fallthru
          _
      $region16: #{tpu_custom_call.1} parent=5 // pred_fallthru
        _
      %p292 = scmp.le.s32.totalorder 1, %s23
      %p293 = scmp.lt.s32.totalorder %s23, 3
      %p294 = pnand %p292, %p293
      %p295 = pneg %p294
      // Predicated region
      $region37: #{tpu_custom_call.1} parent=5 // pred_check
        _
      $region38: #{tpu_custom_call.1} parent=5 // pred_check_branch
        %297 = sbr.rel (%p294) target = $region40
      $region39: #{tpu_custom_call.1} parent=5 // pred_region
        %s298 = ssub.s32 %s23, 1
        %s299 = sand.u32 %s36, 1
        %s300 = scalar_lea.sflag [#allocation3], %s299
        %s301 = sand.u32 %s36, 1
        %s302 = smul.addr %s301, 32
        %s303 = scalar_lea.vmem [#allocation2], %s302
        // Predicated region
        $region41: #{tpu_custom_call.1} parent=39 // pred_check
          %p304 = pneg %p49
        $region42: #{tpu_custom_call.1} parent=39 // pred_check_branch
          %306 = sbr.rel (%p304) target = $region44
        $region43: #{tpu_custom_call.1} parent=39 // pred_region
          %308 = dma.done %s300, 512
        $region44: #{tpu_custom_call.1} parent=39 // pred_fallthru
          _
        %s309 = sand.u32 %s28, 1
        %s310 = scalar_lea.sflag [#allocation6], %s309
        %s311 = sand.u32 %s62, 1
        %s312 = smul.addr %s311, 32
        %s313 = scalar_lea.vmem [#allocation5], %s312
        // Predicated region
        $region45: #{tpu_custom_call.1} parent=39 // pred_check
          %p314 = pneg %p75
        $region46: #{tpu_custom_call.1} parent=39 // pred_check_branch
          %316 = sbr.rel (%p314) target = $region48
        $region47: #{tpu_custom_call.1} parent=39 // pred_region
          %318 = dma.done %s310, 512
        $region48: #{tpu_custom_call.1} parent=39 // pred_fallthru
          _
        %s319 = sand.u32 %s28, 1
        %s320 = scalar_lea.sflag [#allocation6], %s319
        %s321 = sand.u32 %s88, 1
        %s322 = smul.addr %s321, 32
        %s323 = scalar_lea.vmem [#allocation7], %s322
        // Predicated region
        $region49: #{tpu_custom_call.1} parent=39 // pred_check
          %p324 = pneg %p101
        $region50: #{tpu_custom_call.1} parent=39 // pred_check_branch
          %326 = sbr.rel (%p324) target = $region52
        $region51: #{tpu_custom_call.1} parent=39 // pred_region
          %328 = dma.done %s320, 512
        $region52: #{tpu_custom_call.1} parent=39 // pred_fallthru
          _
        %s329 = sand.u32 %s114, 1
        %s330 = scalar_lea.sflag [#allocation9], %s329
        %s331 = sand.u32 %s114, 1
        %s332 = smul.addr %s331, 96
        %s333 = scalar_lea.vmem [#allocation8], %s332
        // Predicated region
        $region53: #{tpu_custom_call.1} parent=39 // pred_check
          %p334 = pneg %p127
        $region54: #{tpu_custom_call.1} parent=39 // pred_check_branch
          %336 = sbr.rel (%p334) target = $region56
        $region55: #{tpu_custom_call.1} parent=39 // pred_region
          %338 = dma.done %s330, 1536
        $region56: #{tpu_custom_call.1} parent=39 // pred_fallthru
          _
        %s339 = sand.u32 %s36, 1
        %s340 = scalar_lea.sflag [#allocation3], %s339
        %s341 = sand.u32 %s36, 1
        %s342 = smul.addr %s341, 32
        %s343 = scalar_lea.vmem [#allocation2], %s342
        %p344 = pneg %p49
        %p345 = pneg %p46
        %s346 = sand.u32 %s28, 1
        %s347 = scalar_lea.sflag [#allocation6], %s346
        %s348 = sand.u32 %s62, 1
        %s349 = smul.addr %s348, 32
        %s350 = scalar_lea.vmem [#allocation5], %s349
        %p351 = pneg %p75
        %p352 = pneg %p72
        %s353 = sand.u32 %s28, 1
        %s354 = scalar_lea.sflag [#allocation6], %s353
        %s355 = sand.u32 %s88, 1
        %s356 = smul.addr %s355, 32
        %s357 = scalar_lea.vmem [#allocation7], %s356
        %p358 = pneg %p101
        %p359 = pneg %p98
        %s360 = sand.u32 %s114, 1
        %s361 = scalar_lea.sflag [#allocation9], %s360
        %s362 = sand.u32 %s114, 1
        %s363 = smul.addr %s362, 96
        %s364 = scalar_lea.vmem [#allocation8], %s363
        %p365 = pneg %p127
        %p366 = pneg %p124
        %p367 = scmp.lt.s32.totalorder %s28, 1
        %s368 = scalar_select %p367, %s28, 1
        %s369 = scalar_lea.vmem %s4, %s368
        %p370 = pneg %p153
        %p371 = pneg %p150
        %p372 = pneg %p179
        %p373 = pneg %p176
        %s374 = sand.u32 %s166, 1
        %s375 = scalar_lea.sflag [#allocation4], %s374
        %s376 = sand.u32 %s166, 1
        %s377 = smul.addr %s376, 4
        %s378 = scalar_lea.vmem [#allocation10], %s377
        %p379 = scmp.lt.s32.totalorder %s28, 1
        %s380 = scalar_select %p379, %s28, 1
        %s381 = scalar_lea.vmem %s4, %s380
        %v382 = vld [vmem:[%s333] sm:$0xff]
        %v383 = vld [vmem:[%s333 + $0x8] sm:$0xff]
        %v384 = vld [vmem:[%s333 + $0x10] sm:$0xff]
        %v385 = vld [vmem:[%s333 + $0x18] sm:$0xff]
        %s386 = scalar_lea.vmem %s333, 32 [#allocation8]
        %v387 = vld [vmem:[%s386] sm:$0xff]
        %v388 = vld [vmem:[%s386 + $0x8] sm:$0xff]
        %v389 = vld [vmem:[%s386 + $0x10] sm:$0xff]
        %v390 = vld [vmem:[%s386 + $0x18] sm:$0xff]
        %s391 = scalar_lea.vmem %s333, 64 [#allocation8]
        %v392 = vld [vmem:[%s391] sm:$0xff]
        %v393 = vld [vmem:[%s391 + $0x8] sm:$0xff]
        %v394 = vld [vmem:[%s391 + $0x10] sm:$0xff]
        %v395 = vld [vmem:[%s391 + $0x18] sm:$0xff]
        %v396 = vld [vmem:[%s381] sm:$0x1]
        %s397 = smul.u32 %s28, 7
        %s398 = smul.u32 %s397, 4
        %s399 = scalar_lea.vmem %s303, %s398 [#allocation2]
        %v400 = vld [vmem:[%s399] sm:$0xf]
        %s401 = scalar_lea.vmem %s313, %s398 [#allocation5]
        %v402 = vld [vmem:[%s401] sm:$0xf]
        %s403 = scalar_lea.vmem %s323, %s398 [#allocation7]
        %v404 = vld [vmem:[%s403] sm:$0xf]
        %vm405 = vcmask 261120
        %v407 = vsel %vm405, 0.0, 0
        %409 = vmatpush.msra.mxu0 0.0
        %410 = vmatpush.msra.mxu0 0.0
        %411 = vmatpush.msra.mxu0 0.0
        %412 = vmatpush.msra.mxu0 0.0
        %413 = vmatpush.msra.mxu0 0.0
        %414 = vmatpush.msra.mxu0 0.0
        %415 = vmatpush.msra.mxu0 0.0
        %416 = vmatpush.msra.mxu0 0.0
        %417 = vmatpush.msra.mxu0 0.0
        %418 = vmatpush.msra.mxu0 0.0
        %419 = vmatpush.msra.mxu0 0.0
        %420 = vmatpush.msra.mxu0 0.0
        %421 = vmatpush.msra.mxu0 %v385
        %422 = vmatpush.msra.mxu0 %v384
        %423 = vmatpush.msra.mxu0 %v383
        %424 = vmatpush.msra.mxu0 %v382
        %425 = vmatmul.f32.gmra.mxu0 %v407
        %v426 = vpop.f32.mrf.mxu0
        %v427 = vadd.f32 0.0, %v426
        %428 = vdwg.mxu0
        %v429 = vadd.f32 %v400, %v427
        %v430 = vxor.u32 %v429, 2147483648
        %v431 = vmul.f32 %v430, 1.442695
        %v432 = vpow.pop %v431
        %v433 = vadd.f32 %v432, 1.0
        %v434 = vrcp.pop %v433
        %v435 = vmul.f32 %v433, %v434
        %v436 = vsub.f32 1.0, %v435
        %v437 = vmul.f32 %v434, %v436
        %v438 = vadd.f32 %v434, %v437
        %vm439 = vweird.f32 %v433
        %vm440 = vweird.f32 %v434
        %vm441 = vmor %vm439, %vm440
        %v442 = vsel %vm441, %v434, %v438
        %v443 = vand.u32 2147483647, %v433
        %vm444 = vcmp.eq.f32.partialorder %v443, 8.507059e+37
        %v445 = vand.u32 %v433, 2147483648
        %v446 = vor.u32 1.1754944e-38, %v445
        %v447 = vsel %vm444, %v446, %v442
        %v448 = vmul.f32 1.0, %v447
        %449 = vmatpush.msra.mxu0 0.0
        %450 = vmatpush.msra.mxu0 0.0
        %451 = vmatpush.msra.mxu0 0.0
        %452 = vmatpush.msra.mxu0 0.0
        %453 = vmatpush.msra.mxu0 0.0
        %454 = vmatpush.msra.mxu0 0.0
        %455 = vmatpush.msra.mxu0 0.0
        %456 = vmatpush.msra.mxu0 0.0
        %457 = vmatpush.msra.mxu0 0.0
        %458 = vmatpush.msra.mxu0 0.0
        %459 = vmatpush.msra.mxu0 0.0
        %460 = vmatpush.msra.mxu0 0.0
        %461 = vmatpush.msra.mxu0 %v390
        %462 = vmatpush.msra.mxu0 %v389
        %463 = vmatpush.msra.mxu0 %v388
        %464 = vmatpush.msra.mxu0 %v387
        %465 = vmatmul.f32.gmra.mxu0 %v407
        %v466 = vpop.f32.mrf.mxu0
        %v467 = vadd.f32 0.0, %v466
        %468 = vdwg.mxu0
        %v469 = vadd.f32 %v402, %v467
        %v470 = vxor.u32 %v469, 2147483648
        %v471 = vmul.f32 %v470, 1.442695
        %v472 = vpow.pop %v471
        %v473 = vadd.f32 %v472, 1.0
        %v474 = vrcp.pop %v473
        %v475 = vmul.f32 %v473, %v474
        %v476 = vsub.f32 1.0, %v475
        %v477 = vmul.f32 %v474, %v476
        %v478 = vadd.f32 %v474, %v477
        %vm479 = vweird.f32 %v473
        %vm480 = vweird.f32 %v474
        %vm481 = vmor %vm479, %vm480
        %v482 = vsel %vm481, %v474, %v478
        %v483 = vand.u32 2147483647, %v473
        %vm484 = vcmp.eq.f32.partialorder %v483, 8.507059e+37
        %v485 = vand.u32 %v473, 2147483648
        %v486 = vor.u32 1.1754944e-38, %v485
        %v487 = vsel %vm484, %v486, %v482
        %v488 = vmul.f32 1.0, %v487
        %v490 = vperm.slane %v396, 0
        %492 = vmatpush.msra.mxu0 0.0
        %493 = vmatpush.msra.mxu0 0.0
        %494 = vmatpush.msra.mxu0 0.0
        %495 = vmatpush.msra.mxu0 0.0
        %496 = vmatpush.msra.mxu0 0.0
        %497 = vmatpush.msra.mxu0 0.0
        %498 = vmatpush.msra.mxu0 0.0
        %499 = vmatpush.msra.mxu0 0.0
        %500 = vmatpush.msra.mxu0 0.0
        %501 = vmatpush.msra.mxu0 0.0
        %502 = vmatpush.msra.mxu0 0.0
        %503 = vmatpush.msra.mxu0 0.0
        %504 = vmatpush.msra.mxu0 %v395
        %505 = vmatpush.msra.mxu0 %v394
        %506 = vmatpush.msra.mxu0 %v393
        %507 = vmatpush.msra.mxu0 %v392
        %508 = vmatmul.f32.gmra.mxu0 %v407
        %v509 = vpop.f32.mrf.mxu0
        %v510 = vadd.f32 %v490, %v509
        %511 = vdwg.mxu0
        %v512 = vmul.f32 %v448, %v510
        %v513 = vadd.f32 %v404, %v512
        %v514 = vtanh.pop %v513
        %v515 = vsub.f32 1.0, %v488
        %v516 = vmul.f32 %v515, %v514
        %v517 = vmul.f32 %v488, 0.0
        %v518 = vadd.f32 %v516, %v517
        %s519 = smul.u32 %s28, 2
        %s520 = ssub.s32 1, %s519
        %s521 = sadd.s32 %s397, %s520
        %s522 = smul.u32 %s521, 4
        %s523 = scalar_lea.vmem %s303, %s522 [#allocation2]
        %v524 = vld [vmem:[%s523] sm:$0xf]
        %s525 = scalar_lea.vmem %s313, %s522 [#allocation5]
        %v526 = vld [vmem:[%s525] sm:$0xf]
        %s527 = scalar_lea.vmem %s323, %s522 [#allocation7]
        %v528 = vld [vmem:[%s527] sm:$0xf]
        %v530 = vsel %vm405, %v518, 0
        %532 = vmatpush.msra.mxu0 0.0
        %533 = vmatpush.msra.mxu0 0.0
        %534 = vmatpush.msra.mxu0 0.0
        %535 = vmatpush.msra.mxu0 0.0
        %536 = vmatpush.msra.mxu0 0.0
        %537 = vmatpush.msra.mxu0 0.0
        %538 = vmatpush.msra.mxu0 0.0
        %539 = vmatpush.msra.mxu0 0.0
        %540 = vmatpush.msra.mxu0 0.0
        %541 = vmatpush.msra.mxu0 0.0
        %542 = vmatpush.msra.mxu0 0.0
        %543 = vmatpush.msra.mxu0 0.0
        %544 = vmatpush.msra.mxu0 %v385
        %545 = vmatpush.msra.mxu0 %v384
        %546 = vmatpush.msra.mxu0 %v383
        %547 = vmatpush.msra.mxu0 %v382
        %548 = vmatmul.f32.gmra.mxu0 %v530
        %v549 = vpop.f32.mrf.mxu0
        %v550 = vadd.f32 0.0, %v549
        %551 = vdwg.mxu0
        %v552 = vadd.f32 %v524, %v550
        %v553 = vxor.u32 %v552, 2147483648
        %v554 = vmul.f32 %v553, 1.442695
        %v555 = vpow.pop %v554
        %v556 = vadd.f32 %v555, 1.0
        %v557 = vrcp.pop %v556
        %v558 = vmul.f32 %v556, %v557
        %v559 = vsub.f32 1.0, %v558
        %v560 = vmul.f32 %v557, %v559
        %v561 = vadd.f32 %v557, %v560
        %vm562 = vweird.f32 %v556
        %vm563 = vweird.f32 %v557
        %vm564 = vmor %vm562, %vm563
        %v565 = vsel %vm564, %v557, %v561
        %v566 = vand.u32 2147483647, %v556
        %vm567 = vcmp.eq.f32.partialorder %v566, 8.507059e+37
        %v568 = vand.u32 %v556, 2147483648
        %v569 = vor.u32 1.1754944e-38, %v568
        %v570 = vsel %vm567, %v569, %v565
        %v571 = vmul.f32 1.0, %v570
        %572 = vmatpush.msra.mxu0 0.0
        %573 = vmatpush.msra.mxu0 0.0
        %574 = vmatpush.msra.mxu0 0.0
        %575 = vmatpush.msra.mxu0 0.0
        %576 = vmatpush.msra.mxu0 0.0
        %577 = vmatpush.msra.mxu0 0.0
        %578 = vmatpush.msra.mxu0 0.0
        %579 = vmatpush.msra.mxu0 0.0
        %580 = vmatpush.msra.mxu0 0.0
        %581 = vmatpush.msra.mxu0 0.0
        %582 = vmatpush.msra.mxu0 0.0
        %583 = vmatpush.msra.mxu0 0.0
        %584 = vmatpush.msra.mxu0 %v390
        %585 = vmatpush.msra.mxu0 %v389
        %586 = vmatpush.msra.mxu0 %v388
        %587 = vmatpush.msra.mxu0 %v387
        %588 = vmatmul.f32.gmra.mxu0 %v530
        %v589 = vpop.f32.mrf.mxu0
        %v590 = vadd.f32 0.0, %v589
        %591 = vdwg.mxu0
        %v592 = vadd.f32 %v526, %v590
        %v593 = vxor.u32 %v592, 2147483648
        %v594 = vmul.f32 %v593, 1.442695
        %v595 = vpow.pop %v594
        %v596 = vadd.f32 %v595, 1.0
        %v597 = vrcp.pop %v596
        %v598 = vmul.f32 %v596, %v597
        %v599 = vsub.f32 1.0, %v598
        %v600 = vmul.f32 %v597, %v599
        %v601 = vadd.f32 %v597, %v600
        %vm602 = vweird.f32 %v596
        %vm603 = vweird.f32 %v597
        %vm604 = vmor %vm602, %vm603
        %v605 = vsel %vm604, %v597, %v601
        %v606 = vand.u32 2147483647, %v596
        %vm607 = vcmp.eq.f32.partialorder %v606, 8.507059e+37
        %v608 = vand.u32 %v596, 2147483648
        %v609 = vor.u32 1.1754944e-38, %v608
        %v610 = vsel %vm607, %v609, %v605
        %v611 = vmul.f32 1.0, %v610
        %612 = vmatpush.msra.mxu0 0.0
        %613 = vmatpush.msra.mxu0 0.0
        %614 = vmatpush.msra.mxu0 0.0
        %615 = vmatpush.msra.mxu0 0.0
        %616 = vmatpush.msra.mxu0 0.0
        %617 = vmatpush.msra.mxu0 0.0
        %618 = vmatpush.msra.mxu0 0.0
        %619 = vmatpush.msra.mxu0 0.0
        %620 = vmatpush.msra.mxu0 0.0
        %621 = vmatpush.msra.mxu0 0.0
        %622 = vmatpush.msra.mxu0 0.0
        %623 = vmatpush.msra.mxu0 0.0
        %624 = vmatpush.msra.mxu0 %v395
        %625 = vmatpush.msra.mxu0 %v394
        %626 = vmatpush.msra.mxu0 %v393
        %627 = vmatpush.msra.mxu0 %v392
        %628 = vmatmul.f32.gmra.mxu0 %v530
        %v629 = vpop.f32.mrf.mxu0
        %v630 = vadd.f32 %v490, %v629
        %631 = vdwg.mxu0
        %v632 = vmul.f32 %v571, %v630
        %v633 = vadd.f32 %v528, %v632
        %v634 = vtanh.pop %v633
        %v635 = vsub.f32 1.0, %v611
        %v636 = vmul.f32 %v635, %v634
        %v637 = vmul.f32 %v611, %v518
        %v638 = vadd.f32 %v636, %v637
        %s639 = smul.u32 %s520, 2
        %s640 = sadd.s32 %s397, %s639
        %s641 = smul.u32 %s640, 4
        %s642 = scalar_lea.vmem %s303, %s641 [#allocation2]
        %v643 = vld [vmem:[%s642] sm:$0xf]
        %s644 = scalar_lea.vmem %s313, %s641 [#allocation5]
        %v645 = vld [vmem:[%s644] sm:$0xf]
        %s646 = scalar_lea.vmem %s323, %s641 [#allocation7]
        %v647 = vld [vmem:[%s646] sm:$0xf]
        %v649 = vsel %vm405, %v638, 0
        %651 = vmatpush.msra.mxu0 0.0
        %652 = vmatpush.msra.mxu0 0.0
        %653 = vmatpush.msra.mxu0 0.0
        %654 = vmatpush.msra.mxu0 0.0
        %655 = vmatpush.msra.mxu0 0.0
        %656 = vmatpush.msra.mxu0 0.0
        %657 = vmatpush.msra.mxu0 0.0
        %658 = vmatpush.msra.mxu0 0.0
        %659 = vmatpush.msra.mxu0 0.0
        %660 = vmatpush.msra.mxu0 0.0
        %661 = vmatpush.msra.mxu0 0.0
        %662 = vmatpush.msra.mxu0 0.0
        %663 = vmatpush.msra.mxu0 %v385
        %664 = vmatpush.msra.mxu0 %v384
        %665 = vmatpush.msra.mxu0 %v383
        %666 = vmatpush.msra.mxu0 %v382
        %667 = vmatmul.f32.gmra.mxu0 %v649
        %v668 = vpop.f32.mrf.mxu0
        %v669 = vadd.f32 0.0, %v668
        %670 = vdwg.mxu0
        %v671 = vadd.f32 %v643, %v669
        %v672 = vxor.u32 %v671, 2147483648
        %v673 = vmul.f32 %v672, 1.442695
        %v674 = vpow.pop %v673
        %v675 = vadd.f32 %v674, 1.0
        %v676 = vrcp.pop %v675
        %v677 = vmul.f32 %v675, %v676
        %v678 = vsub.f32 1.0, %v677
        %v679 = vmul.f32 %v676, %v678
        %v680 = vadd.f32 %v676, %v679
        %vm681 = vweird.f32 %v675
        %vm682 = vweird.f32 %v676
        %vm683 = vmor %vm681, %vm682
        %v684 = vsel %vm683, %v676, %v680
        %v685 = vand.u32 2147483647, %v675
        %vm686 = vcmp.eq.f32.partialorder %v685, 8.507059e+37
        %v687 = vand.u32 %v675, 2147483648
        %v688 = vor.u32 1.1754944e-38, %v687
        %v689 = vsel %vm686, %v688, %v684
        %v690 = vmul.f32 1.0, %v689
        %691 = vmatpush.msra.mxu0 0.0
        %692 = vmatpush.msra.mxu0 0.0
        %693 = vmatpush.msra.mxu0 0.0
        %694 = vmatpush.msra.mxu0 0.0
        %695 = vmatpush.msra.mxu0 0.0
        %696 = vmatpush.msra.mxu0 0.0
        %697 = vmatpush.msra.mxu0 0.0
        %698 = vmatpush.msra.mxu0 0.0
        %699 = vmatpush.msra.mxu0 0.0
        %700 = vmatpush.msra.mxu0 0.0
        %701 = vmatpush.msra.mxu0 0.0
        %702 = vmatpush.msra.mxu0 0.0
        %703 = vmatpush.msra.mxu0 %v390
        %704 = vmatpush.msra.mxu0 %v389
        %705 = vmatpush.msra.mxu0 %v388
        %706 = vmatpush.msra.mxu0 %v387
        %707 = vmatmul.f32.gmra.mxu0 %v649
        %v708 = vpop.f32.mrf.mxu0
        %v709 = vadd.f32 0.0, %v708
        %710 = vdwg.mxu0
        %v711 = vadd.f32 %v645, %v709
        %v712 = vxor.u32 %v711, 2147483648
        %v713 = vmul.f32 %v712, 1.442695
        %v714 = vpow.pop %v713
        %v715 = vadd.f32 %v714, 1.0
        %v716 = vrcp.pop %v715
        %v717 = vmul.f32 %v715, %v716
        %v718 = vsub.f32 1.0, %v717
        %v719 = vmul.f32 %v716, %v718
        %v720 = vadd.f32 %v716, %v719
        %vm721 = vweird.f32 %v715
        %vm722 = vweird.f32 %v716
        %vm723 = vmor %vm721, %vm722
        %v724 = vsel %vm723, %v716, %v720
        %v725 = vand.u32 2147483647, %v715
        %vm726 = vcmp.eq.f32.partialorder %v725, 8.507059e+37
        %v727 = vand.u32 %v715, 2147483648
        %v728 = vor.u32 1.1754944e-38, %v727
        %v729 = vsel %vm726, %v728, %v724
        %v730 = vmul.f32 1.0, %v729
        %731 = vmatpush.msra.mxu0 0.0
        %732 = vmatpush.msra.mxu0 0.0
        %733 = vmatpush.msra.mxu0 0.0
        %734 = vmatpush.msra.mxu0 0.0
        %735 = vmatpush.msra.mxu0 0.0
        %736 = vmatpush.msra.mxu0 0.0
        %737 = vmatpush.msra.mxu0 0.0
        %738 = vmatpush.msra.mxu0 0.0
        %739 = vmatpush.msra.mxu0 0.0
        %740 = vmatpush.msra.mxu0 0.0
        %741 = vmatpush.msra.mxu0 0.0
        %742 = vmatpush.msra.mxu0 0.0
        %743 = vmatpush.msra.mxu0 %v395
        %744 = vmatpush.msra.mxu0 %v394
        %745 = vmatpush.msra.mxu0 %v393
        %746 = vmatpush.msra.mxu0 %v392
        %747 = vmatmul.f32.gmra.mxu0 %v649
        %v748 = vpop.f32.mrf.mxu0
        %v749 = vadd.f32 %v490, %v748
        %750 = vdwg.mxu0
        %v751 = vmul.f32 %v690, %v749
        %v752 = vadd.f32 %v647, %v751
        %v753 = vtanh.pop %v752
        %v754 = vsub.f32 1.0, %v730
        %v755 = vmul.f32 %v754, %v753
        %v756 = vmul.f32 %v730, %v638
        %v757 = vadd.f32 %v755, %v756
        %s758 = smul.u32 %s520, 3
        %s759 = sadd.s32 %s397, %s758
        %s760 = smul.u32 %s759, 4
        %s761 = scalar_lea.vmem %s303, %s760 [#allocation2]
        %v762 = vld [vmem:[%s761] sm:$0xf]
        %s763 = scalar_lea.vmem %s313, %s760 [#allocation5]
        %v764 = vld [vmem:[%s763] sm:$0xf]
        %s765 = scalar_lea.vmem %s323, %s760 [#allocation7]
        %v766 = vld [vmem:[%s765] sm:$0xf]
        %v768 = vsel %vm405, %v757, 0
        %770 = vmatpush.msra.mxu0 0.0
        %771 = vmatpush.msra.mxu0 0.0
        %772 = vmatpush.msra.mxu0 0.0
        %773 = vmatpush.msra.mxu0 0.0
        %774 = vmatpush.msra.mxu0 0.0
        %775 = vmatpush.msra.mxu0 0.0
        %776 = vmatpush.msra.mxu0 0.0
        %777 = vmatpush.msra.mxu0 0.0
        %778 = vmatpush.msra.mxu0 0.0
        %779 = vmatpush.msra.mxu0 0.0
        %780 = vmatpush.msra.mxu0 0.0
        %781 = vmatpush.msra.mxu0 0.0
        %782 = vmatpush.msra.mxu0 %v385
        %783 = vmatpush.msra.mxu0 %v384
        %784 = vmatpush.msra.mxu0 %v383
        %785 = vmatpush.msra.mxu0 %v382
        %786 = vmatmul.f32.gmra.mxu0 %v768
        %v787 = vpop.f32.mrf.mxu0
        %v788 = vadd.f32 0.0, %v787
        %789 = vdwg.mxu0
        %v790 = vadd.f32 %v762, %v788
        %v791 = vxor.u32 %v790, 2147483648
        %v792 = vmul.f32 %v791, 1.442695
        %v793 = vpow.pop %v792
        %v794 = vadd.f32 %v793, 1.0
        %v795 = vrcp.pop %v794
        %v796 = vmul.f32 %v794, %v795
        %v797 = vsub.f32 1.0, %v796
        %v798 = vmul.f32 %v795, %v797
        %v799 = vadd.f32 %v795, %v798
        %vm800 = vweird.f32 %v794
        %vm801 = vweird.f32 %v795
        %vm802 = vmor %vm800, %vm801
        %v803 = vsel %vm802, %v795, %v799
        %v804 = vand.u32 2147483647, %v794
        %vm805 = vcmp.eq.f32.partialorder %v804, 8.507059e+37
        %v806 = vand.u32 %v794, 2147483648
        %v807 = vor.u32 1.1754944e-38, %v806
        %v808 = vsel %vm805, %v807, %v803
        %v809 = vmul.f32 1.0, %v808
        %810 = vmatpush.msra.mxu0 0.0
        %811 = vmatpush.msra.mxu0 0.0
        %812 = vmatpush.msra.mxu0 0.0
        %813 = vmatpush.msra.mxu0 0.0
        %814 = vmatpush.msra.mxu0 0.0
        %815 = vmatpush.msra.mxu0 0.0
        %816 = vmatpush.msra.mxu0 0.0
        %817 = vmatpush.msra.mxu0 0.0
        %818 = vmatpush.msra.mxu0 0.0
        %819 = vmatpush.msra.mxu0 0.0
        %820 = vmatpush.msra.mxu0 0.0
        %821 = vmatpush.msra.mxu0 0.0
        %822 = vmatpush.msra.mxu0 %v390
        %823 = vmatpush.msra.mxu0 %v389
        %824 = vmatpush.msra.mxu0 %v388
        %825 = vmatpush.msra.mxu0 %v387
        %826 = vmatmul.f32.gmra.mxu0 %v768
        %v827 = vpop.f32.mrf.mxu0
        %v828 = vadd.f32 0.0, %v827
        %829 = vdwg.mxu0
        %v830 = vadd.f32 %v764, %v828
        %v831 = vxor.u32 %v830, 2147483648
        %v832 = vmul.f32 %v831, 1.442695
        %v833 = vpow.pop %v832
        %v834 = vadd.f32 %v833, 1.0
        %v835 = vrcp.pop %v834
        %v836 = vmul.f32 %v834, %v835
        %v837 = vsub.f32 1.0, %v836
        %v838 = vmul.f32 %v835, %v837
        %v839 = vadd.f32 %v835, %v838
        %vm840 = vweird.f32 %v834
        %vm841 = vweird.f32 %v835
        %vm842 = vmor %vm840, %vm841
        %v843 = vsel %vm842, %v835, %v839
        %v844 = vand.u32 2147483647, %v834
        %vm845 = vcmp.eq.f32.partialorder %v844, 8.507059e+37
        %v846 = vand.u32 %v834, 2147483648
        %v847 = vor.u32 1.1754944e-38, %v846
        %v848 = vsel %vm845, %v847, %v843
        %v849 = vmul.f32 1.0, %v848
        %850 = vmatpush.msra.mxu0 0.0
        %851 = vmatpush.msra.mxu0 0.0
        %852 = vmatpush.msra.mxu0 0.0
        %853 = vmatpush.msra.mxu0 0.0
        %854 = vmatpush.msra.mxu0 0.0
        %855 = vmatpush.msra.mxu0 0.0
        %856 = vmatpush.msra.mxu0 0.0
        %857 = vmatpush.msra.mxu0 0.0
        %858 = vmatpush.msra.mxu0 0.0
        %859 = vmatpush.msra.mxu0 0.0
        %860 = vmatpush.msra.mxu0 0.0
        %861 = vmatpush.msra.mxu0 0.0
        %862 = vmatpush.msra.mxu0 %v395
        %863 = vmatpush.msra.mxu0 %v394
        %864 = vmatpush.msra.mxu0 %v393
        %865 = vmatpush.msra.mxu0 %v392
        %866 = vmatmul.f32.gmra.mxu0 %v768
        %v867 = vpop.f32.mrf.mxu0
        %v868 = vadd.f32 %v490, %v867
        %869 = vdwg.mxu0
        %v870 = vmul.f32 %v809, %v868
        %v871 = vadd.f32 %v766, %v870
        %v872 = vtanh.pop %v871
        %v873 = vsub.f32 1.0, %v849
        %v874 = vmul.f32 %v873, %v872
        %v875 = vmul.f32 %v849, %v757
        %v876 = vadd.f32 %v874, %v875
        %s877 = smul.u32 %s520, 4
        %s878 = sadd.s32 %s397, %s877
        %s879 = smul.u32 %s878, 4
        %s880 = scalar_lea.vmem %s303, %s879 [#allocation2]
        %v881 = vld [vmem:[%s880] sm:$0xf]
        %s882 = scalar_lea.vmem %s313, %s879 [#allocation5]
        %v883 = vld [vmem:[%s882] sm:$0xf]
        %s884 = scalar_lea.vmem %s323, %s879 [#allocation7]
        %v885 = vld [vmem:[%s884] sm:$0xf]
        %v887 = vsel %vm405, %v876, 0
        %889 = vmatpush.msra.mxu0 0.0
        %890 = vmatpush.msra.mxu0 0.0
        %891 = vmatpush.msra.mxu0 0.0
        %892 = vmatpush.msra.mxu0 0.0
        %893 = vmatpush.msra.mxu0 0.0
        %894 = vmatpush.msra.mxu0 0.0
        %895 = vmatpush.msra.mxu0 0.0
        %896 = vmatpush.msra.mxu0 0.0
        %897 = vmatpush.msra.mxu0 0.0
        %898 = vmatpush.msra.mxu0 0.0
        %899 = vmatpush.msra.mxu0 0.0
        %900 = vmatpush.msra.mxu0 0.0
        %901 = vmatpush.msra.mxu0 %v385
        %902 = vmatpush.msra.mxu0 %v384
        %903 = vmatpush.msra.mxu0 %v383
        %904 = vmatpush.msra.mxu0 %v382
        %905 = vmatmul.f32.gmra.mxu0 %v887
        %v906 = vpop.f32.mrf.mxu0
        %v907 = vadd.f32 0.0, %v906
        %908 = vdwg.mxu0
        %v909 = vadd.f32 %v881, %v907
        %v910 = vxor.u32 %v909, 2147483648
        %v911 = vmul.f32 %v910, 1.442695
        %v912 = vpow.pop %v911
        %v913 = vadd.f32 %v912, 1.0
        %v914 = vrcp.pop %v913
        %v915 = vmul.f32 %v913, %v914
        %v916 = vsub.f32 1.0, %v915
        %v917 = vmul.f32 %v914, %v916
        %v918 = vadd.f32 %v914, %v917
        %vm919 = vweird.f32 %v913
        %vm920 = vweird.f32 %v914
        %vm921 = vmor %vm919, %vm920
        %v922 = vsel %vm921, %v914, %v918
        %v923 = vand.u32 2147483647, %v913
        %vm924 = vcmp.eq.f32.partialorder %v923, 8.507059e+37
        %v925 = vand.u32 %v913, 2147483648
        %v926 = vor.u32 1.1754944e-38, %v925
        %v927 = vsel %vm924, %v926, %v922
        %v928 = vmul.f32 1.0, %v927
        %929 = vmatpush.msra.mxu0 0.0
        %930 = vmatpush.msra.mxu0 0.0
        %931 = vmatpush.msra.mxu0 0.0
        %932 = vmatpush.msra.mxu0 0.0
        %933 = vmatpush.msra.mxu0 0.0
        %934 = vmatpush.msra.mxu0 0.0
        %935 = vmatpush.msra.mxu0 0.0
        %936 = vmatpush.msra.mxu0 0.0
        %937 = vmatpush.msra.mxu0 0.0
        %938 = vmatpush.msra.mxu0 0.0
        %939 = vmatpush.msra.mxu0 0.0
        %940 = vmatpush.msra.mxu0 0.0
        %941 = vmatpush.msra.mxu0 %v390
        %942 = vmatpush.msra.mxu0 %v389
        %943 = vmatpush.msra.mxu0 %v388
        %944 = vmatpush.msra.mxu0 %v387
        %945 = vmatmul.f32.gmra.mxu0 %v887
        %v946 = vpop.f32.mrf.mxu0
        %v947 = vadd.f32 0.0, %v946
        %948 = vdwg.mxu0
        %v949 = vadd.f32 %v883, %v947
        %v950 = vxor.u32 %v949, 2147483648
        %v951 = vmul.f32 %v950, 1.442695
        %v952 = vpow.pop %v951
        %v953 = vadd.f32 %v952, 1.0
        %v954 = vrcp.pop %v953
        %v955 = vmul.f32 %v953, %v954
        %v956 = vsub.f32 1.0, %v955
        %v957 = vmul.f32 %v954, %v956
        %v958 = vadd.f32 %v954, %v957
        %vm959 = vweird.f32 %v953
        %vm960 = vweird.f32 %v954
        %vm961 = vmor %vm959, %vm960
        %v962 = vsel %vm961, %v954, %v958
        %v963 = vand.u32 2147483647, %v953
        %vm964 = vcmp.eq.f32.partialorder %v963, 8.507059e+37
        %v965 = vand.u32 %v953, 2147483648
        %v966 = vor.u32 1.1754944e-38, %v965
        %v967 = vsel %vm964, %v966, %v962
        %v968 = vmul.f32 1.0, %v967
        %969 = vmatpush.msra.mxu0 0.0
        %970 = vmatpush.msra.mxu0 0.0
        %971 = vmatpush.msra.mxu0 0.0
        %972 = vmatpush.msra.mxu0 0.0
        %973 = vmatpush.msra.mxu0 0.0
        %974 = vmatpush.msra.mxu0 0.0
        %975 = vmatpush.msra.mxu0 0.0
        %976 = vmatpush.msra.mxu0 0.0
        %977 = vmatpush.msra.mxu0 0.0
        %978 = vmatpush.msra.mxu0 0.0
        %979 = vmatpush.msra.mxu0 0.0
        %980 = vmatpush.msra.mxu0 0.0
        %981 = vmatpush.msra.mxu0 %v395
        %982 = vmatpush.msra.mxu0 %v394
        %983 = vmatpush.msra.mxu0 %v393
        %984 = vmatpush.msra.mxu0 %v392
        %985 = vmatmul.f32.gmra.mxu0 %v887
        %v986 = vpop.f32.mrf.mxu0
        %v987 = vadd.f32 %v490, %v986
        %988 = vdwg.mxu0
        %v989 = vmul.f32 %v928, %v987
        %v990 = vadd.f32 %v885, %v989
        %v991 = vtanh.pop %v990
        %v992 = vsub.f32 1.0, %v968
        %v993 = vmul.f32 %v992, %v991
        %v994 = vmul.f32 %v968, %v876
        %v995 = vadd.f32 %v993, %v994
        %s996 = smul.u32 %s520, 5
        %s997 = sadd.s32 %s397, %s996
        %s998 = smul.u32 %s997, 4
        %s999 = scalar_lea.vmem %s303, %s998 [#allocation2]
        %v1000 = vld [vmem:[%s999] sm:$0xf]
        %s1001 = scalar_lea.vmem %s313, %s998 [#allocation5]
        %v1002 = vld [vmem:[%s1001] sm:$0xf]
        %s1003 = scalar_lea.vmem %s323, %s998 [#allocation7]
        %v1004 = vld [vmem:[%s1003] sm:$0xf]
        %v1006 = vsel %vm405, %v995, 0
        %1008 = vmatpush.msra.mxu0 0.0
        %1009 = vmatpush.msra.mxu0 0.0
        %1010 = vmatpush.msra.mxu0 0.0
        %1011 = vmatpush.msra.mxu0 0.0
        %1012 = vmatpush.msra.mxu0 0.0
        %1013 = vmatpush.msra.mxu0 0.0
        %1014 = vmatpush.msra.mxu0 0.0
        %1015 = vmatpush.msra.mxu0 0.0
        %1016 = vmatpush.msra.mxu0 0.0
        %1017 = vmatpush.msra.mxu0 0.0
        %1018 = vmatpush.msra.mxu0 0.0
        %1019 = vmatpush.msra.mxu0 0.0
        %1020 = vmatpush.msra.mxu0 %v385
        %1021 = vmatpush.msra.mxu0 %v384
        %1022 = vmatpush.msra.mxu0 %v383
        %1023 = vmatpush.msra.mxu0 %v382
        %1024 = vmatmul.f32.gmra.mxu0 %v1006
        %v1025 = vpop.f32.mrf.mxu0
        %v1026 = vadd.f32 0.0, %v1025
        %1027 = vdwg.mxu0
        %v1028 = vadd.f32 %v1000, %v1026
        %v1029 = vxor.u32 %v1028, 2147483648
        %v1030 = vmul.f32 %v1029, 1.442695
        %v1031 = vpow.pop %v1030
        %v1032 = vadd.f32 %v1031, 1.0
        %v1033 = vrcp.pop %v1032
        %v1034 = vmul.f32 %v1032, %v1033
        %v1035 = vsub.f32 1.0, %v1034
        %v1036 = vmul.f32 %v1033, %v1035
        %v1037 = vadd.f32 %v1033, %v1036
        %vm1038 = vweird.f32 %v1032
        %vm1039 = vweird.f32 %v1033
        %vm1040 = vmor %vm1038, %vm1039
        %v1041 = vsel %vm1040, %v1033, %v1037
        %v1042 = vand.u32 2147483647, %v1032
        %vm1043 = vcmp.eq.f32.partialorder %v1042, 8.507059e+37
        %v1044 = vand.u32 %v1032, 2147483648
        %v1045 = vor.u32 1.1754944e-38, %v1044
        %v1046 = vsel %vm1043, %v1045, %v1041
        %v1047 = vmul.f32 1.0, %v1046
        %1048 = vmatpush.msra.mxu0 0.0
        %1049 = vmatpush.msra.mxu0 0.0
        %1050 = vmatpush.msra.mxu0 0.0
        %1051 = vmatpush.msra.mxu0 0.0
        %1052 = vmatpush.msra.mxu0 0.0
        %1053 = vmatpush.msra.mxu0 0.0
        %1054 = vmatpush.msra.mxu0 0.0
        %1055 = vmatpush.msra.mxu0 0.0
        %1056 = vmatpush.msra.mxu0 0.0
        %1057 = vmatpush.msra.mxu0 0.0
        %1058 = vmatpush.msra.mxu0 0.0
        %1059 = vmatpush.msra.mxu0 0.0
        %1060 = vmatpush.msra.mxu0 %v390
        %1061 = vmatpush.msra.mxu0 %v389
        %1062 = vmatpush.msra.mxu0 %v388
        %1063 = vmatpush.msra.mxu0 %v387
        %1064 = vmatmul.f32.gmra.mxu0 %v1006
        %v1065 = vpop.f32.mrf.mxu0
        %v1066 = vadd.f32 0.0, %v1065
        %1067 = vdwg.mxu0
        %v1068 = vadd.f32 %v1002, %v1066
        %v1069 = vxor.u32 %v1068, 2147483648
        %v1070 = vmul.f32 %v1069, 1.442695
        %v1071 = vpow.pop %v1070
        %v1072 = vadd.f32 %v1071, 1.0
        %v1073 = vrcp.pop %v1072
        %v1074 = vmul.f32 %v1072, %v1073
        %v1075 = vsub.f32 1.0, %v1074
        %v1076 = vmul.f32 %v1073, %v1075
        %v1077 = vadd.f32 %v1073, %v1076
        %vm1078 = vweird.f32 %v1072
        %vm1079 = vweird.f32 %v1073
        %vm1080 = vmor %vm1078, %vm1079
        %v1081 = vsel %vm1080, %v1073, %v1077
        %v1082 = vand.u32 2147483647, %v1072
        %vm1083 = vcmp.eq.f32.partialorder %v1082, 8.507059e+37
        %v1084 = vand.u32 %v1072, 2147483648
        %v1085 = vor.u32 1.1754944e-38, %v1084
        %v1086 = vsel %vm1083, %v1085, %v1081
        %v1087 = vmul.f32 1.0, %v1086
        %1088 = vmatpush.msra.mxu0 0.0
        %1089 = vmatpush.msra.mxu0 0.0
        %1090 = vmatpush.msra.mxu0 0.0
        %1091 = vmatpush.msra.mxu0 0.0
        %1092 = vmatpush.msra.mxu0 0.0
        %1093 = vmatpush.msra.mxu0 0.0
        %1094 = vmatpush.msra.mxu0 0.0
        %1095 = vmatpush.msra.mxu0 0.0
        %1096 = vmatpush.msra.mxu0 0.0
        %1097 = vmatpush.msra.mxu0 0.0
        %1098 = vmatpush.msra.mxu0 0.0
        %1099 = vmatpush.msra.mxu0 0.0
        %1100 = vmatpush.msra.mxu0 %v395
        %1101 = vmatpush.msra.mxu0 %v394
        %1102 = vmatpush.msra.mxu0 %v393
        %1103 = vmatpush.msra.mxu0 %v392
        %1104 = vmatmul.f32.gmra.mxu0 %v1006
        %v1105 = vpop.f32.mrf.mxu0
        %v1106 = vadd.f32 %v490, %v1105
        %1107 = vdwg.mxu0
        %v1108 = vmul.f32 %v1047, %v1106
        %v1109 = vadd.f32 %v1004, %v1108
        %v1110 = vtanh.pop %v1109
        %v1111 = vsub.f32 1.0, %v1087
        %v1112 = vmul.f32 %v1111, %v1110
        %v1113 = vmul.f32 %v1087, %v995
        %v1114 = vadd.f32 %v1112, %v1113
        %s1115 = smul.u32 %s520, 6
        %s1116 = sadd.s32 %s397, %s1115
        %s1117 = smul.u32 %s1116, 4
        %s1118 = scalar_lea.vmem %s303, %s1117 [#allocation2]
        %v1119 = vld [vmem:[%s1118] sm:$0xf]
        %s1120 = scalar_lea.vmem %s313, %s1117 [#allocation5]
        %v1121 = vld [vmem:[%s1120] sm:$0xf]
        %s1122 = scalar_lea.vmem %s323, %s1117 [#allocation7]
        %v1123 = vld [vmem:[%s1122] sm:$0xf]
        %v1125 = vsel %vm405, %v1114, 0
        %1127 = vmatpush.msra.mxu0 0.0
        %1128 = vmatpush.msra.mxu0 0.0
        %1129 = vmatpush.msra.mxu0 0.0
        %1130 = vmatpush.msra.mxu0 0.0
        %1131 = vmatpush.msra.mxu0 0.0
        %1132 = vmatpush.msra.mxu0 0.0
        %1133 = vmatpush.msra.mxu0 0.0
        %1134 = vmatpush.msra.mxu0 0.0
        %1135 = vmatpush.msra.mxu0 0.0
        %1136 = vmatpush.msra.mxu0 0.0
        %1137 = vmatpush.msra.mxu0 0.0
        %1138 = vmatpush.msra.mxu0 0.0
        %1139 = vmatpush.msra.mxu0 %v385
        %1140 = vmatpush.msra.mxu0 %v384
        %1141 = vmatpush.msra.mxu0 %v383
        %1142 = vmatpush.msra.mxu0 %v382
        %1143 = vmatmul.f32.gmra.mxu0 %v1125
        %v1144 = vpop.f32.mrf.mxu0
        %v1145 = vadd.f32 0.0, %v1144
        %1146 = vdwg.mxu0
        %v1147 = vadd.f32 %v1119, %v1145
        %v1148 = vxor.u32 %v1147, 2147483648
        %v1149 = vmul.f32 %v1148, 1.442695
        %v1150 = vpow.pop %v1149
        %v1151 = vadd.f32 %v1150, 1.0
        %v1152 = vrcp.pop %v1151
        %v1153 = vmul.f32 %v1151, %v1152
        %v1154 = vsub.f32 1.0, %v1153
        %v1155 = vmul.f32 %v1152, %v1154
        %v1156 = vadd.f32 %v1152, %v1155
        %vm1157 = vweird.f32 %v1151
        %vm1158 = vweird.f32 %v1152
        %vm1159 = vmor %vm1157, %vm1158
        %v1160 = vsel %vm1159, %v1152, %v1156
        %v1161 = vand.u32 2147483647, %v1151
        %vm1162 = vcmp.eq.f32.partialorder %v1161, 8.507059e+37
        %v1163 = vand.u32 %v1151, 2147483648
        %v1164 = vor.u32 1.1754944e-38, %v1163
        %v1165 = vsel %vm1162, %v1164, %v1160
        %v1166 = vmul.f32 1.0, %v1165
        %1167 = vmatpush.msra.mxu0 0.0
        %1168 = vmatpush.msra.mxu0 0.0
        %1169 = vmatpush.msra.mxu0 0.0
        %1170 = vmatpush.msra.mxu0 0.0
        %1171 = vmatpush.msra.mxu0 0.0
        %1172 = vmatpush.msra.mxu0 0.0
        %1173 = vmatpush.msra.mxu0 0.0
        %1174 = vmatpush.msra.mxu0 0.0
        %1175 = vmatpush.msra.mxu0 0.0
        %1176 = vmatpush.msra.mxu0 0.0
        %1177 = vmatpush.msra.mxu0 0.0
        %1178 = vmatpush.msra.mxu0 0.0
        %1179 = vmatpush.msra.mxu0 %v390
        %1180 = vmatpush.msra.mxu0 %v389
        %1181 = vmatpush.msra.mxu0 %v388
        %1182 = vmatpush.msra.mxu0 %v387
        %1183 = vmatmul.f32.gmra.mxu0 %v1125
        %v1184 = vpop.f32.mrf.mxu0
        %v1185 = vadd.f32 0.0, %v1184
        %1186 = vdwg.mxu0
        %v1187 = vadd.f32 %v1121, %v1185
        %v1188 = vxor.u32 %v1187, 2147483648
        %v1189 = vmul.f32 %v1188, 1.442695
        %v1190 = vpow.pop %v1189
        %v1191 = vadd.f32 %v1190, 1.0
        %v1192 = vrcp.pop %v1191
        %v1193 = vmul.f32 %v1191, %v1192
        %v1194 = vsub.f32 1.0, %v1193
        %v1195 = vmul.f32 %v1192, %v1194
        %v1196 = vadd.f32 %v1192, %v1195
        %vm1197 = vweird.f32 %v1191
        %vm1198 = vweird.f32 %v1192
        %vm1199 = vmor %vm1197, %vm1198
        %v1200 = vsel %vm1199, %v1192, %v1196
        %v1201 = vand.u32 2147483647, %v1191
        %vm1202 = vcmp.eq.f32.partialorder %v1201, 8.507059e+37
        %v1203 = vand.u32 %v1191, 2147483648
        %v1204 = vor.u32 1.1754944e-38, %v1203
        %v1205 = vsel %vm1202, %v1204, %v1200
        %v1206 = vmul.f32 1.0, %v1205
        %1207 = vmatpush.msra.mxu0 0.0
        %1208 = vmatpush.msra.mxu0 0.0
        %1209 = vmatpush.msra.mxu0 0.0
        %1210 = vmatpush.msra.mxu0 0.0
        %1211 = vmatpush.msra.mxu0 0.0
        %1212 = vmatpush.msra.mxu0 0.0
        %1213 = vmatpush.msra.mxu0 0.0
        %1214 = vmatpush.msra.mxu0 0.0
        %1215 = vmatpush.msra.mxu0 0.0
        %1216 = vmatpush.msra.mxu0 0.0
        %1217 = vmatpush.msra.mxu0 0.0
        %1218 = vmatpush.msra.mxu0 0.0
        %1219 = vmatpush.msra.mxu0 %v395
        %1220 = vmatpush.msra.mxu0 %v394
        %1221 = vmatpush.msra.mxu0 %v393
        %1222 = vmatpush.msra.mxu0 %v392
        %1223 = vmatmul.f32.gmra.mxu0 %v1125
        %v1224 = vpop.f32.mrf.mxu0
        %v1225 = vadd.f32 %v490, %v1224
        %1226 = vdwg.mxu0
        %v1227 = vmul.f32 %v1166, %v1225
        %v1228 = vadd.f32 %v1123, %v1227
        %v1229 = vtanh.pop %v1228
        %v1230 = vsub.f32 1.0, %v1206
        %v1231 = vmul.f32 %v1230, %v1229
        %v1232 = vmul.f32 %v1206, %v1114
        %v1233 = vadd.f32 %v1231, %v1232
        %s1234 = smul.u32 %s520, 7
        %s1235 = sadd.s32 %s397, %s1234
        %s1236 = smul.u32 %s1235, 4
        %s1237 = scalar_lea.vmem %s303, %s1236 [#allocation2]
        %v1238 = vld [vmem:[%s1237] sm:$0xf]
        %s1239 = scalar_lea.vmem %s313, %s1236 [#allocation5]
        %v1240 = vld [vmem:[%s1239] sm:$0xf]
        %s1241 = scalar_lea.vmem %s323, %s1236 [#allocation7]
        %v1242 = vld [vmem:[%s1241] sm:$0xf]
        %v1244 = vsel %vm405, %v1233, 0
        %1246 = vmatpush.msra.mxu0 0.0
        %1247 = vmatpush.msra.mxu0 0.0
        %1248 = vmatpush.msra.mxu0 0.0
        %1249 = vmatpush.msra.mxu0 0.0
        %1250 = vmatpush.msra.mxu0 0.0
        %1251 = vmatpush.msra.mxu0 0.0
        %1252 = vmatpush.msra.mxu0 0.0
        %1253 = vmatpush.msra.mxu0 0.0
        %1254 = vmatpush.msra.mxu0 0.0
        %1255 = vmatpush.msra.mxu0 0.0
        %1256 = vmatpush.msra.mxu0 0.0
        %1257 = vmatpush.msra.mxu0 0.0
        %1258 = vmatpush.msra.mxu0 %v385
        %1259 = vmatpush.msra.mxu0 %v384
        %1260 = vmatpush.msra.mxu0 %v383
        %1261 = vmatpush.msra.mxu0 %v382
        %1262 = vmatmul.f32.gmra.mxu0 %v1244
        %v1263 = vpop.f32.mrf.mxu0
        %v1264 = vadd.f32 0.0, %v1263
        %1265 = vdwg.mxu0
        %v1266 = vadd.f32 %v1238, %v1264
        %v1267 = vxor.u32 %v1266, 2147483648
        %v1268 = vmul.f32 %v1267, 1.442695
        %v1269 = vpow.pop %v1268
        %v1270 = vadd.f32 %v1269, 1.0
        %v1271 = vrcp.pop %v1270
        %v1272 = vmul.f32 %v1270, %v1271
        %v1273 = vsub.f32 1.0, %v1272
        %v1274 = vmul.f32 %v1271, %v1273
        %v1275 = vadd.f32 %v1271, %v1274
        %vm1276 = vweird.f32 %v1270
        %vm1277 = vweird.f32 %v1271
        %vm1278 = vmor %vm1276, %vm1277
        %v1279 = vsel %vm1278, %v1271, %v1275
        %v1280 = vand.u32 2147483647, %v1270
        %vm1281 = vcmp.eq.f32.partialorder %v1280, 8.507059e+37
        %v1282 = vand.u32 %v1270, 2147483648
        %v1283 = vor.u32 1.1754944e-38, %v1282
        %v1284 = vsel %vm1281, %v1283, %v1279
        %v1285 = vmul.f32 1.0, %v1284
        %1286 = vmatpush.msra.mxu0 0.0
        %1287 = vmatpush.msra.mxu0 0.0
        %1288 = vmatpush.msra.mxu0 0.0
        %1289 = vmatpush.msra.mxu0 0.0
        %1290 = vmatpush.msra.mxu0 0.0
        %1291 = vmatpush.msra.mxu0 0.0
        %1292 = vmatpush.msra.mxu0 0.0
        %1293 = vmatpush.msra.mxu0 0.0
        %1294 = vmatpush.msra.mxu0 0.0
        %1295 = vmatpush.msra.mxu0 0.0
        %1296 = vmatpush.msra.mxu0 0.0
        %1297 = vmatpush.msra.mxu0 0.0
        %1298 = vmatpush.msra.mxu0 %v390
        %1299 = vmatpush.msra.mxu0 %v389
        %1300 = vmatpush.msra.mxu0 %v388
        %1301 = vmatpush.msra.mxu0 %v387
        %1302 = vmatmul.f32.gmra.mxu0 %v1244
        %v1303 = vpop.f32.mrf.mxu0
        %v1304 = vadd.f32 0.0, %v1303
        %1305 = vdwg.mxu0
        %v1306 = vadd.f32 %v1240, %v1304
        %v1307 = vxor.u32 %v1306, 2147483648
        %v1308 = vmul.f32 %v1307, 1.442695
        %v1309 = vpow.pop %v1308
        %v1310 = vadd.f32 %v1309, 1.0
        %v1311 = vrcp.pop %v1310
        %v1312 = vmul.f32 %v1310, %v1311
        %v1313 = vsub.f32 1.0, %v1312
        %v1314 = vmul.f32 %v1311, %v1313
        %v1315 = vadd.f32 %v1311, %v1314
        %vm1316 = vweird.f32 %v1310
        %vm1317 = vweird.f32 %v1311
        %vm1318 = vmor %vm1316, %vm1317
        %v1319 = vsel %vm1318, %v1311, %v1315
        %v1320 = vand.u32 2147483647, %v1310
        %vm1321 = vcmp.eq.f32.partialorder %v1320, 8.507059e+37
        %v1322 = vand.u32 %v1310, 2147483648
        %v1323 = vor.u32 1.1754944e-38, %v1322
        %v1324 = vsel %vm1321, %v1323, %v1319
        %v1325 = vmul.f32 1.0, %v1324
        %1326 = vmatpush.msra.mxu0 0.0
        %1327 = vmatpush.msra.mxu0 0.0
        %1328 = vmatpush.msra.mxu0 0.0
        %1329 = vmatpush.msra.mxu0 0.0
        %1330 = vmatpush.msra.mxu0 0.0
        %1331 = vmatpush.msra.mxu0 0.0
        %1332 = vmatpush.msra.mxu0 0.0
        %1333 = vmatpush.msra.mxu0 0.0
        %1334 = vmatpush.msra.mxu0 0.0
        %1335 = vmatpush.msra.mxu0 0.0
        %1336 = vmatpush.msra.mxu0 0.0
        %1337 = vmatpush.msra.mxu0 0.0
        %1338 = vmatpush.msra.mxu0 %v395
        %1339 = vmatpush.msra.mxu0 %v394
        %1340 = vmatpush.msra.mxu0 %v393
        %1341 = vmatpush.msra.mxu0 %v392
        %1342 = vmatmul.f32.gmra.mxu0 %v1244
        %v1343 = vpop.f32.mrf.mxu0
        %v1344 = vadd.f32 %v490, %v1343
        %1345 = vdwg.mxu0
        %v1346 = vmul.f32 %v1285, %v1344
        %v1347 = vadd.f32 %v1242, %v1346
        %v1348 = vtanh.pop %v1347
        %v1349 = vsub.f32 1.0, %v1325
        %v1350 = vmul.f32 %v1349, %v1348
        %v1351 = vmul.f32 %v1325, %v1233
        %v1352 = vadd.f32 %v1350, %v1351
        %vm1353 = vcmask 257024
        %1354 = vst.msk [vmem:[%s378] sm:$0xf] %vm1353, %v1352
        %s1355 = sand.u32 %s166, 1
        %s1356 = scalar_lea.sflag [#allocation4], %s1355
        %s1357 = sand.u32 %s166, 1
        %s1358 = smul.addr %s1357, 4
        %s1359 = scalar_lea.vmem [#allocation10], %s1358
        // Predicated region
        $region57: #{tpu_custom_call.1} parent=39 // pred_check
          %p1360 = pneg %p176
        $region58: #{tpu_custom_call.1} parent=39 // pred_check_branch
          %1362 = sbr.rel (%p1360) target = $region60
        $region59: #{tpu_custom_call.1} parent=39 // pred_region
          %1364 = vsyncadd %s1356, 0
          %s1365 = smul.addr %s28, 4
          %s1366 = scalar_lea.hbm %s5, %s1365
          %s1368 = sshll.u32 %s1359, 4
          %s1369 = int_to_ptr.vmem [resolvable:$true] %s1368
          %s1370 = sshll.u32 %s1366, 4
          %s1371 = int_to_ptr.hbm [resolvable:$true] %s1370
          %1373 = dma.vmem_to_hbm [thread:$0]  %s1369, 64, %s1371, %s1356
        $region60: #{tpu_custom_call.1} parent=39 // pred_fallthru
          _
      $region40: #{tpu_custom_call.1} parent=5 // pred_fallthru
        _
      %p1374 = scmp.le.s32.totalorder 2, %s23
      // Predicated region
      $region61: #{tpu_custom_call.1} parent=5 // pred_check
        %p1375 = pneg %p1374
      $region62: #{tpu_custom_call.1} parent=5 // pred_check_branch
        %1377 = sbr.rel (%p1375) target = $region64
      $region63: #{tpu_custom_call.1} parent=5 // pred_region
        %s1378 = ssub.s32 %s23, 2
        // Predicated region
        $region65: #{tpu_custom_call.1} parent=63 // pred_check
          %p1379 = pneg %p182
        $region66: #{tpu_custom_call.1} parent=63 // pred_check_branch
          %1381 = sbr.rel (%p1379) target = $region68
        $region67: #{tpu_custom_call.1} parent=63 // pred_region
          %s1382 = sand.u32 %s167, 1
          %s1383 = scalar_lea.sflag [#allocation4], %s1382
          %s1384 = sand.u32 %s167, 1
          %s1385 = smul.addr %s1384, 4
          %s1386 = scalar_lea.vmem [#allocation10], %s1385
          %1388 = dma.done %s1383, 64
        $region68: #{tpu_custom_call.1} parent=63 // pred_fallthru
          _
      $region64: #{tpu_custom_call.1} parent=5 // pred_fallthru
        _
    $region6: #{tpu_custom_call.1} parent=1 // loop_footer
      %s27 = sadd.s32 1, %s23
    $region7: #{tpu_custom_call.1} parent=1 // loop_footer_branch
      %22 = sbr.rel target = $region3
    $region8: #{tpu_custom_call.1} parent=1 // loop_exit
      _
    %1389 = vsyncpa [#allocation3], 1
    %s1390 = scalar_lea.sflag [#allocation3], 1
    %1391 = vsyncpa %s1390, 1
    %1392 = vsyncpa [#allocation6], 1
    %s1393 = scalar_lea.sflag [#allocation6], 1
    %1394 = vsyncpa %s1393, 1
    %1395 = vsyncpa [#allocation9], 1
    %s1396 = scalar_lea.sflag [#allocation9], 1
    %1397 = vsyncpa %s1396, 1
    %1398 = vsyncpa [#allocation4], 1
    %s1399 = scalar_lea.sflag [#allocation4], 1
    %1400 = vsyncpa %s1399, 1

</llo_original>
